<compile_context>
chip_gen: v7x
topology: tpu7x:2x2x1
jax: 0.10.0
libtpu: 0.0.40
codegen_flags: <defaults>
</compile_context>

<pallas_src>
import functools

import jax
import jax.numpy as jnp
from jax import lax
from jax.experimental import pallas as pl
from jax.experimental.pallas import tpu as pltpu


def sa_block_kernel(x_ref, wqkv_ref, wob_ref, out_ref, *,
                    batch, seq_len, num_heads, dim_head):
    # x_ref   : (B*N, D)      bf16, all batch rows flattened
    # wqkv_ref: (D, 3*H*Dh)   bf16 fused QKV projection, columns ordered
    #                         (qkv, head, d) per Rearrange('b h (qkv l d) -> ...'),
    #                         attention scale already folded into the Q columns
    # wob_ref : (H+1, Dh, D)  bf16; slab [h] = Wo rows for head h, slab [H] row 0 = bias
    # out_ref : (B*N, D)      f32
    inner = num_heads * dim_head
    d_out = out_ref.shape[-1]

    # One fused QKV matmul for every batch row; bf16 MXU operands, f32 accumulate,
    # then drop back to bf16 once so all attention matmul operands are bf16.
    qkv = jnp.dot(x_ref[...], wqkv_ref[...],
                  preferred_element_type=jnp.float32).astype(jnp.bfloat16)  # (B*N, 3*inner)

    bias = wob_ref[num_heads, 0:1, :].astype(jnp.float32)                   # (1, D)

    for b in range(batch):                       # unrolled: B, H small & static
        r0 = b * seq_len
        head_sum = None
        for h in range(num_heads):
            c0 = h * dim_head
            q = qkv[r0:r0 + seq_len, c0:c0 + dim_head]                          # (N, Dh)
            k = qkv[r0:r0 + seq_len, inner + c0:inner + c0 + dim_head]          # (N, Dh)
            v = qkv[r0:r0 + seq_len, 2 * inner + c0:2 * inner + c0 + dim_head]  # (N, Dh)

            # q @ k^T via a contraction on both last dims (no XLU transpose of k).
            s = lax.dot_general(q, k, (((1,), (1,)), ((), ())),
                                preferred_element_type=jnp.float32)             # (N, N) f32
            s = s - jnp.max(s, axis=-1, keepdims=True)
            p = jnp.exp(s)                                                      # f32, unnormalized
            denom = jnp.sum(p, axis=-1, keepdims=True)                          # (N, 1) f32

            # Deferred softmax normalization: matmul first, scale the (N, Dh) result.
            o_un = jnp.dot(p.astype(jnp.bfloat16), v,
                           preferred_element_type=jnp.float32)                  # (N, Dh) f32
            o_bh = o_un * pl.reciprocal(denom, approx=True)                     # (N, Dh) f32

            # Per-head output projection accumulation (no lane-wise concat).
            contrib = jnp.dot(o_bh.astype(jnp.bfloat16), wob_ref[h],
                              preferred_element_type=jnp.float32)               # (N, D) f32
            head_sum = contrib if head_sum is None else head_sum + contrib

        out_ref[r0:r0 + seq_len, :] = (head_sum + bias).astype(out_ref.dtype)


def sa_block_pallas(x, wqkv, wob, *, num_heads, dim_head):
    """x: (B, N, D); wqkv: (D, 3*H*Dh) bf16 with scale folded into the Q columns;
    wob: (H+1, Dh, D) bf16 per-head out-projection slabs, slab [H] row 0 is the bias."""
    B, N, D = x.shape
    inner = num_heads * dim_head
    assert wqkv.shape == (D, 3 * inner)
    assert wob.shape == (num_heads + 1, dim_head, D)

    x2d = x.reshape(B * N, D).astype(jnp.bfloat16)

    kernel = functools.partial(sa_block_kernel, batch=B, seq_len=N,
                               num_heads=num_heads, dim_head=dim_head)
    out2d = pl.pallas_call(
        kernel,
        out_shape=jax.ShapeDtypeStruct((B * N, D), jnp.float32),
        grid_spec=pltpu.PrefetchScalarGridSpec(
            num_scalar_prefetch=0,
            grid=(1,),                                       # single step: no per-step overhead
            in_specs=[
                pl.BlockSpec((B * N, D), lambda i: (0, 0)),                        # x (flattened)
                pl.BlockSpec((D, 3 * inner), lambda i: (0, 0)),                    # fused QKV slab
                pl.BlockSpec((num_heads + 1, dim_head, D), lambda i: (0, 0, 0)),   # Wo + bias slab
            ],
            out_specs=pl.BlockSpec((B * N, D), lambda i: (0, 0)),
        ),
        compiler_params=pltpu.CompilerParams(
            dimension_semantics=("arbitrary",)),             # no 2-TC split for one tiny step
    )(x2d, wqkv, wob)
    return out2d.reshape(B, N, D)


def sa_block_reference(x, w_qkv, w_out, b_out, num_heads, dim_head, scale):
    """Pure-JAX f32 replica of the PyTorch SABlock forward (dropout_rate=0)."""
    B, N, D = x.shape
    qkv = jnp.einsum('bnd,od->bno', x, w_qkv)                 # (B, N, 3*H*Dh)
    qkv = qkv.reshape(B, N, 3, num_heads, dim_head)
    qkv = jnp.transpose(qkv, (2, 0, 3, 1, 4))                 # (3, B, H, N, Dh)
    q, k, v = qkv[0], qkv[1], qkv[2]
    att = jnp.einsum('bhxd,bhyd->bhxy', q, k) * scale
    att = jax.nn.softmax(att, axis=-1)
    o = jnp.einsum('bhxy,bhyd->bhxd', att, v)                 # (B, H, N, Dh)
    o = jnp.transpose(o, (0, 2, 1, 3)).reshape(B, N, num_heads * dim_head)
    return jnp.einsum('bno,do->bnd', o, w_out) + b_out


if __name__ == "__main__":
    # Module config: SABlock(hidden_size=32, num_heads=4) -> dim_head=8, qkv_bias=False,
    # dropout_rate=0.0 (dropout layers are identity), save_attn=False.
    hidden_size = 32
    num_heads = 4
    dim_head = hidden_size // num_heads
    inner_dim = dim_head * num_heads
    scale = dim_head ** (-0.5)

    B, N = 2, 16   # batch, sequence length

    key = jax.random.PRNGKey(0)
    kx, kqkv, kwo, kbo = jax.random.split(key, 4)

    x = jax.random.normal(kx, (B, N, hidden_size), dtype=jnp.float32)

    # Parameters in torch nn.Linear convention (weight: (out_features, in_features)).
    w_qkv = jax.random.normal(kqkv, (3 * inner_dim, hidden_size), jnp.float32) * 0.02
    w_out = jax.random.normal(kwo, (hidden_size, inner_dim), jnp.float32) * 0.02
    b_out = jax.random.normal(kbo, (hidden_size,), jnp.float32) * 0.02

    # ---- kernel weight prep (offline, zero runtime cost) ------------------------
    # Fused (D, 3*H*Dh) slab.  Column ordering is (qkv-major, then head, then d),
    # exactly matching the module's Rearrange('b h (qkv l d) -> qkv b l h d');
    # the kernel's head slices rely on this ordering.  The attention scale is
    # folded into the Q columns only.
    wqkv = w_qkv.T                                           # (D, 3*inner)
    wqkv = wqkv.at[:, :inner_dim].multiply(scale)
    wqkv = wqkv.astype(jnp.bfloat16)

    # Per-head output-projection slabs + bias folded in as one extra slab:
    # wob[h] = W_out.T[h*Dh:(h+1)*Dh, :] for h < H;  wob[H, 0, :] = b_out.
    wo3 = w_out.T.reshape(num_heads, dim_head, hidden_size)  # (H, Dh, D)
    bias_slab = jnp.zeros((1, dim_head, hidden_size), jnp.float32).at[0, 0, :].set(b_out)
    wob = jnp.concatenate([wo3, bias_slab], axis=0).astype(jnp.bfloat16)   # (H+1, Dh, D)

    out = sa_block_pallas(x, wqkv, wob, num_heads=num_heads, dim_head=dim_head)
    out = jax.block_until_ready(out)

    ref = sa_block_reference(x, w_qkv, w_out, b_out, num_heads, dim_head, scale)
    assert out.shape == (B, N, hidden_size)
    # Tolerance accounts for bf16 MXU operands (~0.4% per operand) and the
    # approximate EUP reciprocal in the deferred softmax normalization.
    assert jnp.allclose(out, ref, atol=1e-2, rtol=1e-2), "mismatch vs reference"

    print("KERNEL_OK")
</pallas_src>

<mosaic_0001>
module attributes {stable_mosaic.version = 11 : i64} {
  func.func @sa_block_kernel(%arg0: i32, %arg1: memref<32x32xbf16, #tpu.memory_space<vmem>>, %arg2: memref<32x96xbf16, #tpu.memory_space<vmem>>, %arg3: memref<5x8x32xbf16, #tpu.memory_space<vmem>>, %arg4: memref<32x32xf32, #tpu.memory_space<vmem>>) attributes {dimension_semantics = [#tpu.dimension_semantics<arbitrary>], iteration_bounds = array<i64: 1>, scalar_prefetch = 0 : i64, scratch_operands = 0 : i64, tpu.core_type = #tpu.core_type<tc>, window_params = [{pipeline_mode = #tpu.pipeline_mode<synchronous>, transform_indices = @transform_0, window_bounds = array<i64: 32, 32>}, {pipeline_mode = #tpu.pipeline_mode<synchronous>, transform_indices = @transform_1, window_bounds = array<i64: 32, 96>}, {pipeline_mode = #tpu.pipeline_mode<synchronous>, transform_indices = @transform_2, window_bounds = array<i64: 5, 8, 32>}, {pipeline_mode = #tpu.pipeline_mode<synchronous>, transform_indices = @transform_3, window_bounds = array<i64: 32, 32>}]} {
    %c0 = arith.constant 0 : index
    %c0_0 = arith.constant 0 : index
    %0 = vector.load %arg1[%c0, %c0_0] : memref<32x32xbf16, #tpu.memory_space<vmem>>, vector<32x32xbf16>
    %c0_1 = arith.constant 0 : index
    %c0_2 = arith.constant 0 : index
    %1 = vector.load %arg2[%c0_1, %c0_2] : memref<32x96xbf16, #tpu.memory_space<vmem>>, vector<32x96xbf16>
    %cst = arith.constant dense<0.000000e+00> : vector<32x96xf32>
    %2 = tpu.matmul %0, %1, %cst {dimension_numbers = #tpu.dot_dimension_numbers<[1], [0], [0], [1], [0, 0, 1, 1], [], []>} : vector<32x32xbf16>, vector<32x96xbf16>, vector<32x96xf32> -> vector<32x96xf32>
    %3 = arith.truncf %2 : vector<32x96xf32> to vector<32x96xbf16>
    %c4 = arith.constant 4 : index
    %c0_3 = arith.constant 0 : index
    %c0_4 = arith.constant 0 : index
    %4 = vector.load %arg3[%c4, %c0_3, %c0_4] : memref<5x8x32xbf16, #tpu.memory_space<vmem>>, vector<1x1x32xbf16>
    %5 = vector.shape_cast %4 : vector<1x1x32xbf16> to vector<1x32xbf16>
    %6 = arith.extf %5 : vector<1x32xbf16> to vector<1x32xf32>
    %7 = vector.extract_strided_slice %3 {offsets = [0, 0], sizes = [16, 8], strides = [1, 1]} : vector<32x96xbf16> to vector<16x8xbf16>
    %8 = vector.extract_strided_slice %3 {offsets = [0, 32], sizes = [16, 8], strides = [1, 1]} : vector<32x96xbf16> to vector<16x8xbf16>
    %9 = vector.extract_strided_slice %3 {offsets = [0, 64], sizes = [16, 8], strides = [1, 1]} : vector<32x96xbf16> to vector<16x8xbf16>
    %cst_5 = arith.constant dense<0.000000e+00> : vector<16x16xf32>
    %10 = tpu.matmul %7, %8, %cst_5 {dimension_numbers = #tpu.dot_dimension_numbers<[1], [1], [0], [0], [0, 0, 1, 0], [], []>} : vector<16x8xbf16>, vector<16x8xbf16>, vector<16x16xf32> -> vector<16x16xf32>
    %cst_6 = arith.constant dense<0xFF800000> : vector<16xf32>
    %11 = vector.multi_reduction <maximumf>, %10, %cst_6 [1] : vector<16x16xf32> to vector<16xf32>
    %12 = vector.shape_cast %11 : vector<16xf32> to vector<16x1xf32>
    %13 = vector.broadcast %12 : vector<16x1xf32> to vector<16x16xf32>
    %14 = arith.subf %10, %13 : vector<16x16xf32>
    %15 = math.exp %14 : vector<16x16xf32>
    %cst_7 = arith.constant dense<0.000000e+00> : vector<16xf32>
    %16 = vector.multi_reduction <add>, %15, %cst_7 [1] : vector<16x16xf32> to vector<16xf32>
    %17 = vector.shape_cast %16 : vector<16xf32> to vector<16x1xf32>
    %18 = arith.truncf %15 : vector<16x16xf32> to vector<16x16xbf16>
    %cst_8 = arith.constant dense<0.000000e+00> : vector<16x8xf32>
    %19 = tpu.matmul %18, %9, %cst_8 {dimension_numbers = #tpu.dot_dimension_numbers<[1], [0], [0], [1], [0, 0, 1, 1], [], []>} : vector<16x16xbf16>, vector<16x8xbf16>, vector<16x8xf32> -> vector<16x8xf32>
    %20 = tpu.reciprocal %17 {approx = true} : vector<16x1xf32> -> vector<16x1xf32>
    %21 = vector.broadcast %20 : vector<16x1xf32> to vector<16x8xf32>
    %22 = arith.mulf %19, %21 : vector<16x8xf32>
    %23 = arith.truncf %22 : vector<16x8xf32> to vector<16x8xbf16>
    %c0_9 = arith.constant 0 : index
    %c0_10 = arith.constant 0 : index
    %c0_11 = arith.constant 0 : index
    %24 = vector.load %arg3[%c0_9, %c0_10, %c0_11] : memref<5x8x32xbf16, #tpu.memory_space<vmem>>, vector<1x8x32xbf16>
    %25 = vector.shape_cast %24 : vector<1x8x32xbf16> to vector<8x32xbf16>
    %cst_12 = arith.constant dense<0.000000e+00> : vector<16x32xf32>
    %26 = tpu.matmul %23, %25, %cst_12 {dimension_numbers = #tpu.dot_dimension_numbers<[1], [0], [0], [1], [0, 0, 1, 1], [], []>} : vector<16x8xbf16>, vector<8x32xbf16>, vector<16x32xf32> -> vector<16x32xf32>
    %27 = vector.extract_strided_slice %3 {offsets = [0, 8], sizes = [16, 8], strides = [1, 1]} : vector<32x96xbf16> to vector<16x8xbf16>
    %28 = vector.extract_strided_slice %3 {offsets = [0, 40], sizes = [16, 8], strides = [1, 1]} : vector<32x96xbf16> to vector<16x8xbf16>
    %29 = vector.extract_strided_slice %3 {offsets = [0, 72], sizes = [16, 8], strides = [1, 1]} : vector<32x96xbf16> to vector<16x8xbf16>
    %cst_13 = arith.constant dense<0.000000e+00> : vector<16x16xf32>
    %30 = tpu.matmul %27, %28, %cst_13 {dimension_numbers = #tpu.dot_dimension_numbers<[1], [1], [0], [0], [0, 0, 1, 0], [], []>} : vector<16x8xbf16>, vector<16x8xbf16>, vector<16x16xf32> -> vector<16x16xf32>
    %cst_14 = arith.constant dense<0xFF800000> : vector<16xf32>
    %31 = vector.multi_reduction <maximumf>, %30, %cst_14 [1] : vector<16x16xf32> to vector<16xf32>
    %32 = vector.shape_cast %31 : vector<16xf32> to vector<16x1xf32>
    %33 = vector.broadcast %32 : vector<16x1xf32> to vector<16x16xf32>
    %34 = arith.subf %30, %33 : vector<16x16xf32>
    %35 = math.exp %34 : vector<16x16xf32>
    %cst_15 = arith.constant dense<0.000000e+00> : vector<16xf32>
    %36 = vector.multi_reduction <add>, %35, %cst_15 [1] : vector<16x16xf32> to vector<16xf32>
    %37 = vector.shape_cast %36 : vector<16xf32> to vector<16x1xf32>
    %38 = arith.truncf %35 : vector<16x16xf32> to vector<16x16xbf16>
    %cst_16 = arith.constant dense<0.000000e+00> : vector<16x8xf32>
    %39 = tpu.matmul %38, %29, %cst_16 {dimension_numbers = #tpu.dot_dimension_numbers<[1], [0], [0], [1], [0, 0, 1, 1], [], []>} : vector<16x16xbf16>, vector<16x8xbf16>, vector<16x8xf32> -> vector<16x8xf32>
    %40 = tpu.reciprocal %37 {approx = true} : vector<16x1xf32> -> vector<16x1xf32>
    %41 = vector.broadcast %40 : vector<16x1xf32> to vector<16x8xf32>
    %42 = arith.mulf %39, %41 : vector<16x8xf32>
    %43 = arith.truncf %42 : vector<16x8xf32> to vector<16x8xbf16>
    %c1 = arith.constant 1 : index
    %c0_17 = arith.constant 0 : index
    %c0_18 = arith.constant 0 : index
    %44 = vector.load %arg3[%c1, %c0_17, %c0_18] : memref<5x8x32xbf16, #tpu.memory_space<vmem>>, vector<1x8x32xbf16>
    %45 = vector.shape_cast %44 : vector<1x8x32xbf16> to vector<8x32xbf16>
    %cst_19 = arith.constant dense<0.000000e+00> : vector<16x32xf32>
    %46 = tpu.matmul %43, %45, %cst_19 {dimension_numbers = #tpu.dot_dimension_numbers<[1], [0], [0], [1], [0, 0, 1, 1], [], []>} : vector<16x8xbf16>, vector<8x32xbf16>, vector<16x32xf32> -> vector<16x32xf32>
    %47 = arith.addf %26, %46 : vector<16x32xf32>
    %48 = vector.extract_strided_slice %3 {offsets = [0, 16], sizes = [16, 8], strides = [1, 1]} : vector<32x96xbf16> to vector<16x8xbf16>
    %49 = vector.extract_strided_slice %3 {offsets = [0, 48], sizes = [16, 8], strides = [1, 1]} : vector<32x96xbf16> to vector<16x8xbf16>
    %50 = vector.extract_strided_slice %3 {offsets = [0, 80], sizes = [16, 8], strides = [1, 1]} : vector<32x96xbf16> to vector<16x8xbf16>
    %cst_20 = arith.constant dense<0.000000e+00> : vector<16x16xf32>
    %51 = tpu.matmul %48, %49, %cst_20 {dimension_numbers = #tpu.dot_dimension_numbers<[1], [1], [0], [0], [0, 0, 1, 0], [], []>} : vector<16x8xbf16>, vector<16x8xbf16>, vector<16x16xf32> -> vector<16x16xf32>
    %cst_21 = arith.constant dense<0xFF800000> : vector<16xf32>
    %52 = vector.multi_reduction <maximumf>, %51, %cst_21 [1] : vector<16x16xf32> to vector<16xf32>
    %53 = vector.shape_cast %52 : vector<16xf32> to vector<16x1xf32>
    %54 = vector.broadcast %53 : vector<16x1xf32> to vector<16x16xf32>
    %55 = arith.subf %51, %54 : vector<16x16xf32>
    %56 = math.exp %55 : vector<16x16xf32>
    %cst_22 = arith.constant dense<0.000000e+00> : vector<16xf32>
    %57 = vector.multi_reduction <add>, %56, %cst_22 [1] : vector<16x16xf32> to vector<16xf32>
    %58 = vector.shape_cast %57 : vector<16xf32> to vector<16x1xf32>
    %59 = arith.truncf %56 : vector<16x16xf32> to vector<16x16xbf16>
    %cst_23 = arith.constant dense<0.000000e+00> : vector<16x8xf32>
    %60 = tpu.matmul %59, %50, %cst_23 {dimension_numbers = #tpu.dot_dimension_numbers<[1], [0], [0], [1], [0, 0, 1, 1], [], []>} : vector<16x16xbf16>, vector<16x8xbf16>, vector<16x8xf32> -> vector<16x8xf32>
    %61 = tpu.reciprocal %58 {approx = true} : vector<16x1xf32> -> vector<16x1xf32>
    %62 = vector.broadcast %61 : vector<16x1xf32> to vector<16x8xf32>
    %63 = arith.mulf %60, %62 : vector<16x8xf32>
    %64 = arith.truncf %63 : vector<16x8xf32> to vector<16x8xbf16>
    %c2 = arith.constant 2 : index
    %c0_24 = arith.constant 0 : index
    %c0_25 = arith.constant 0 : index
    %65 = vector.load %arg3[%c2, %c0_24, %c0_25] : memref<5x8x32xbf16, #tpu.memory_space<vmem>>, vector<1x8x32xbf16>
    %66 = vector.shape_cast %65 : vector<1x8x32xbf16> to vector<8x32xbf16>
    %cst_26 = arith.constant dense<0.000000e+00> : vector<16x32xf32>
    %67 = tpu.matmul %64, %66, %cst_26 {dimension_numbers = #tpu.dot_dimension_numbers<[1], [0], [0], [1], [0, 0, 1, 1], [], []>} : vector<16x8xbf16>, vector<8x32xbf16>, vector<16x32xf32> -> vector<16x32xf32>
    %68 = arith.addf %47, %67 : vector<16x32xf32>
    %69 = vector.extract_strided_slice %3 {offsets = [0, 24], sizes = [16, 8], strides = [1, 1]} : vector<32x96xbf16> to vector<16x8xbf16>
    %70 = vector.extract_strided_slice %3 {offsets = [0, 56], sizes = [16, 8], strides = [1, 1]} : vector<32x96xbf16> to vector<16x8xbf16>
    %71 = vector.extract_strided_slice %3 {offsets = [0, 88], sizes = [16, 8], strides = [1, 1]} : vector<32x96xbf16> to vector<16x8xbf16>
    %cst_27 = arith.constant dense<0.000000e+00> : vector<16x16xf32>
    %72 = tpu.matmul %69, %70, %cst_27 {dimension_numbers = #tpu.dot_dimension_numbers<[1], [1], [0], [0], [0, 0, 1, 0], [], []>} : vector<16x8xbf16>, vector<16x8xbf16>, vector<16x16xf32> -> vector<16x16xf32>
    %cst_28 = arith.constant dense<0xFF800000> : vector<16xf32>
    %73 = vector.multi_reduction <maximumf>, %72, %cst_28 [1] : vector<16x16xf32> to vector<16xf32>
    %74 = vector.shape_cast %73 : vector<16xf32> to vector<16x1xf32>
    %75 = vector.broadcast %74 : vector<16x1xf32> to vector<16x16xf32>
    %76 = arith.subf %72, %75 : vector<16x16xf32>
    %77 = math.exp %76 : vector<16x16xf32>
    %cst_29 = arith.constant dense<0.000000e+00> : vector<16xf32>
    %78 = vector.multi_reduction <add>, %77, %cst_29 [1] : vector<16x16xf32> to vector<16xf32>
    %79 = vector.shape_cast %78 : vector<16xf32> to vector<16x1xf32>
    %80 = arith.truncf %77 : vector<16x16xf32> to vector<16x16xbf16>
    %cst_30 = arith.constant dense<0.000000e+00> : vector<16x8xf32>
    %81 = tpu.matmul %80, %71, %cst_30 {dimension_numbers = #tpu.dot_dimension_numbers<[1], [0], [0], [1], [0, 0, 1, 1], [], []>} : vector<16x16xbf16>, vector<16x8xbf16>, vector<16x8xf32> -> vector<16x8xf32>
    %82 = tpu.reciprocal %79 {approx = true} : vector<16x1xf32> -> vector<16x1xf32>
    %83 = vector.broadcast %82 : vector<16x1xf32> to vector<16x8xf32>
    %84 = arith.mulf %81, %83 : vector<16x8xf32>
    %85 = arith.truncf %84 : vector<16x8xf32> to vector<16x8xbf16>
    %c3 = arith.constant 3 : index
    %c0_31 = arith.constant 0 : index
    %c0_32 = arith.constant 0 : index
    %86 = vector.load %arg3[%c3, %c0_31, %c0_32] : memref<5x8x32xbf16, #tpu.memory_space<vmem>>, vector<1x8x32xbf16>
    %87 = vector.shape_cast %86 : vector<1x8x32xbf16> to vector<8x32xbf16>
    %cst_33 = arith.constant dense<0.000000e+00> : vector<16x32xf32>
    %88 = tpu.matmul %85, %87, %cst_33 {dimension_numbers = #tpu.dot_dimension_numbers<[1], [0], [0], [1], [0, 0, 1, 1], [], []>} : vector<16x8xbf16>, vector<8x32xbf16>, vector<16x32xf32> -> vector<16x32xf32>
    %89 = arith.addf %68, %88 : vector<16x32xf32>
    %90 = vector.broadcast %6 : vector<1x32xf32> to vector<16x32xf32>
    %91 = arith.addf %89, %90 : vector<16x32xf32>
    %c0_34 = arith.constant 0 : index
    %c0_35 = arith.constant 0 : index
    %92 = vector.load %arg4[%c0_34, %c0_35] : memref<32x32xf32, #tpu.memory_space<vmem>>, vector<16x32xf32>
    tpu.vector_store %arg4[%c0_34, %c0_35], %91 {strides = array<i32>} : memref<32x32xf32, #tpu.memory_space<vmem>>, vector<16x32xf32>,
    %93 = vector.extract_strided_slice %3 {offsets = [16, 0], sizes = [16, 8], strides = [1, 1]} : vector<32x96xbf16> to vector<16x8xbf16>
    %94 = vector.extract_strided_slice %3 {offsets = [16, 32], sizes = [16, 8], strides = [1, 1]} : vector<32x96xbf16> to vector<16x8xbf16>
    %95 = vector.extract_strided_slice %3 {offsets = [16, 64], sizes = [16, 8], strides = [1, 1]} : vector<32x96xbf16> to vector<16x8xbf16>
    %cst_36 = arith.constant dense<0.000000e+00> : vector<16x16xf32>
    %96 = tpu.matmul %93, %94, %cst_36 {dimension_numbers = #tpu.dot_dimension_numbers<[1], [1], [0], [0], [0, 0, 1, 0], [], []>} : vector<16x8xbf16>, vector<16x8xbf16>, vector<16x16xf32> -> vector<16x16xf32>
    %cst_37 = arith.constant dense<0xFF800000> : vector<16xf32>
    %97 = vector.multi_reduction <maximumf>, %96, %cst_37 [1] : vector<16x16xf32> to vector<16xf32>
    %98 = vector.shape_cast %97 : vector<16xf32> to vector<16x1xf32>
    %99 = vector.broadcast %98 : vector<16x1xf32> to vector<16x16xf32>
    %100 = arith.subf %96, %99 : vector<16x16xf32>
    %101 = math.exp %100 : vector<16x16xf32>
    %cst_38 = arith.constant dense<0.000000e+00> : vector<16xf32>
    %102 = vector.multi_reduction <add>, %101, %cst_38 [1] : vector<16x16xf32> to vector<16xf32>
    %103 = vector.shape_cast %102 : vector<16xf32> to vector<16x1xf32>
    %104 = arith.truncf %101 : vector<16x16xf32> to vector<16x16xbf16>
    %cst_39 = arith.constant dense<0.000000e+00> : vector<16x8xf32>
    %105 = tpu.matmul %104, %95, %cst_39 {dimension_numbers = #tpu.dot_dimension_numbers<[1], [0], [0], [1], [0, 0, 1, 1], [], []>} : vector<16x16xbf16>, vector<16x8xbf16>, vector<16x8xf32> -> vector<16x8xf32>
    %106 = tpu.reciprocal %103 {approx = true} : vector<16x1xf32> -> vector<16x1xf32>
    %107 = vector.broadcast %106 : vector<16x1xf32> to vector<16x8xf32>
    %108 = arith.mulf %105, %107 : vector<16x8xf32>
    %109 = arith.truncf %108 : vector<16x8xf32> to vector<16x8xbf16>
    %c0_40 = arith.constant 0 : index
    %c0_41 = arith.constant 0 : index
    %c0_42 = arith.constant 0 : index
    %110 = vector.load %arg3[%c0_40, %c0_41, %c0_42] : memref<5x8x32xbf16, #tpu.memory_space<vmem>>, vector<1x8x32xbf16>
    %111 = vector.shape_cast %110 : vector<1x8x32xbf16> to vector<8x32xbf16>
    %cst_43 = arith.constant dense<0.000000e+00> : vector<16x32xf32>
    %112 = tpu.matmul %109, %111, %cst_43 {dimension_numbers = #tpu.dot_dimension_numbers<[1], [0], [0], [1], [0, 0, 1, 1], [], []>} : vector<16x8xbf16>, vector<8x32xbf16>, vector<16x32xf32> -> vector<16x32xf32>
    %113 = vector.extract_strided_slice %3 {offsets = [16, 8], sizes = [16, 8], strides = [1, 1]} : vector<32x96xbf16> to vector<16x8xbf16>
    %114 = vector.extract_strided_slice %3 {offsets = [16, 40], sizes = [16, 8], strides = [1, 1]} : vector<32x96xbf16> to vector<16x8xbf16>
    %115 = vector.extract_strided_slice %3 {offsets = [16, 72], sizes = [16, 8], strides = [1, 1]} : vector<32x96xbf16> to vector<16x8xbf16>
    %cst_44 = arith.constant dense<0.000000e+00> : vector<16x16xf32>
    %116 = tpu.matmul %113, %114, %cst_44 {dimension_numbers = #tpu.dot_dimension_numbers<[1], [1], [0], [0], [0, 0, 1, 0], [], []>} : vector<16x8xbf16>, vector<16x8xbf16>, vector<16x16xf32> -> vector<16x16xf32>
    %cst_45 = arith.constant dense<0xFF800000> : vector<16xf32>
    %117 = vector.multi_reduction <maximumf>, %116, %cst_45 [1] : vector<16x16xf32> to vector<16xf32>
    %118 = vector.shape_cast %117 : vector<16xf32> to vector<16x1xf32>
    %119 = vector.broadcast %118 : vector<16x1xf32> to vector<16x16xf32>
    %120 = arith.subf %116, %119 : vector<16x16xf32>
    %121 = math.exp %120 : vector<16x16xf32>
    %cst_46 = arith.constant dense<0.000000e+00> : vector<16xf32>
    %122 = vector.multi_reduction <add>, %121, %cst_46 [1] : vector<16x16xf32> to vector<16xf32>
    %123 = vector.shape_cast %122 : vector<16xf32> to vector<16x1xf32>
    %124 = arith.truncf %121 : vector<16x16xf32> to vector<16x16xbf16>
    %cst_47 = arith.constant dense<0.000000e+00> : vector<16x8xf32>
    %125 = tpu.matmul %124, %115, %cst_47 {dimension_numbers = #tpu.dot_dimension_numbers<[1], [0], [0], [1], [0, 0, 1, 1], [], []>} : vector<16x16xbf16>, vector<16x8xbf16>, vector<16x8xf32> -> vector<16x8xf32>
    %126 = tpu.reciprocal %123 {approx = true} : vector<16x1xf32> -> vector<16x1xf32>
    %127 = vector.broadcast %126 : vector<16x1xf32> to vector<16x8xf32>
    %128 = arith.mulf %125, %127 : vector<16x8xf32>
    %129 = arith.truncf %128 : vector<16x8xf32> to vector<16x8xbf16>
    %c1_48 = arith.constant 1 : index
    %c0_49 = arith.constant 0 : index
    %c0_50 = arith.constant 0 : index
    %130 = vector.load %arg3[%c1_48, %c0_49, %c0_50] : memref<5x8x32xbf16, #tpu.memory_space<vmem>>, vector<1x8x32xbf16>
    %131 = vector.shape_cast %130 : vector<1x8x32xbf16> to vector<8x32xbf16>
    %cst_51 = arith.constant dense<0.000000e+00> : vector<16x32xf32>
    %132 = tpu.matmul %129, %131, %cst_51 {dimension_numbers = #tpu.dot_dimension_numbers<[1], [0], [0], [1], [0, 0, 1, 1], [], []>} : vector<16x8xbf16>, vector<8x32xbf16>, vector<16x32xf32> -> vector<16x32xf32>
    %133 = arith.addf %112, %132 : vector<16x32xf32>
    %134 = vector.extract_strided_slice %3 {offsets = [16, 16], sizes = [16, 8], strides = [1, 1]} : vector<32x96xbf16> to vector<16x8xbf16>
    %135 = vector.extract_strided_slice %3 {offsets = [16, 48], sizes = [16, 8], strides = [1, 1]} : vector<32x96xbf16> to vector<16x8xbf16>
    %136 = vector.extract_strided_slice %3 {offsets = [16, 80], sizes = [16, 8], strides = [1, 1]} : vector<32x96xbf16> to vector<16x8xbf16>
    %cst_52 = arith.constant dense<0.000000e+00> : vector<16x16xf32>
    %137 = tpu.matmul %134, %135, %cst_52 {dimension_numbers = #tpu.dot_dimension_numbers<[1], [1], [0], [0], [0, 0, 1, 0], [], []>} : vector<16x8xbf16>, vector<16x8xbf16>, vector<16x16xf32> -> vector<16x16xf32>
    %cst_53 = arith.constant dense<0xFF800000> : vector<16xf32>
    %138 = vector.multi_reduction <maximumf>, %137, %cst_53 [1] : vector<16x16xf32> to vector<16xf32>
    %139 = vector.shape_cast %138 : vector<16xf32> to vector<16x1xf32>
    %140 = vector.broadcast %139 : vector<16x1xf32> to vector<16x16xf32>
    %141 = arith.subf %137, %140 : vector<16x16xf32>
    %142 = math.exp %141 : vector<16x16xf32>
    %cst_54 = arith.constant dense<0.000000e+00> : vector<16xf32>
    %143 = vector.multi_reduction <add>, %142, %cst_54 [1] : vector<16x16xf32> to vector<16xf32>
    %144 = vector.shape_cast %143 : vector<16xf32> to vector<16x1xf32>
    %145 = arith.truncf %142 : vector<16x16xf32> to vector<16x16xbf16>
    %cst_55 = arith.constant dense<0.000000e+00> : vector<16x8xf32>
    %146 = tpu.matmul %145, %136, %cst_55 {dimension_numbers = #tpu.dot_dimension_numbers<[1], [0], [0], [1], [0, 0, 1, 1], [], []>} : vector<16x16xbf16>, vector<16x8xbf16>, vector<16x8xf32> -> vector<16x8xf32>
    %147 = tpu.reciprocal %144 {approx = true} : vector<16x1xf32> -> vector<16x1xf32>
    %148 = vector.broadcast %147 : vector<16x1xf32> to vector<16x8xf32>
    %149 = arith.mulf %146, %148 : vector<16x8xf32>
    %150 = arith.truncf %149 : vector<16x8xf32> to vector<16x8xbf16>
    %c2_56 = arith.constant 2 : index
    %c0_57 = arith.constant 0 : index
    %c0_58 = arith.constant 0 : index
    %151 = vector.load %arg3[%c2_56, %c0_57, %c0_58] : memref<5x8x32xbf16, #tpu.memory_space<vmem>>, vector<1x8x32xbf16>
    %152 = vector.shape_cast %151 : vector<1x8x32xbf16> to vector<8x32xbf16>
    %cst_59 = arith.constant dense<0.000000e+00> : vector<16x32xf32>
    %153 = tpu.matmul %150, %152, %cst_59 {dimension_numbers = #tpu.dot_dimension_numbers<[1], [0], [0], [1], [0, 0, 1, 1], [], []>} : vector<16x8xbf16>, vector<8x32xbf16>, vector<16x32xf32> -> vector<16x32xf32>
    %154 = arith.addf %133, %153 : vector<16x32xf32>
    %155 = vector.extract_strided_slice %3 {offsets = [16, 24], sizes = [16, 8], strides = [1, 1]} : vector<32x96xbf16> to vector<16x8xbf16>
    %156 = vector.extract_strided_slice %3 {offsets = [16, 56], sizes = [16, 8], strides = [1, 1]} : vector<32x96xbf16> to vector<16x8xbf16>
    %157 = vector.extract_strided_slice %3 {offsets = [16, 88], sizes = [16, 8], strides = [1, 1]} : vector<32x96xbf16> to vector<16x8xbf16>
    %cst_60 = arith.constant dense<0.000000e+00> : vector<16x16xf32>
    %158 = tpu.matmul %155, %156, %cst_60 {dimension_numbers = #tpu.dot_dimension_numbers<[1], [1], [0], [0], [0, 0, 1, 0], [], []>} : vector<16x8xbf16>, vector<16x8xbf16>, vector<16x16xf32> -> vector<16x16xf32>
    %cst_61 = arith.constant dense<0xFF800000> : vector<16xf32>
    %159 = vector.multi_reduction <maximumf>, %158, %cst_61 [1] : vector<16x16xf32> to vector<16xf32>
    %160 = vector.shape_cast %159 : vector<16xf32> to vector<16x1xf32>
    %161 = vector.broadcast %160 : vector<16x1xf32> to vector<16x16xf32>
    %162 = arith.subf %158, %161 : vector<16x16xf32>
    %163 = math.exp %162 : vector<16x16xf32>
    %cst_62 = arith.constant dense<0.000000e+00> : vector<16xf32>
    %164 = vector.multi_reduction <add>, %163, %cst_62 [1] : vector<16x16xf32> to vector<16xf32>
    %165 = vector.shape_cast %164 : vector<16xf32> to vector<16x1xf32>
    %166 = arith.truncf %163 : vector<16x16xf32> to vector<16x16xbf16>
    %cst_63 = arith.constant dense<0.000000e+00> : vector<16x8xf32>
    %167 = tpu.matmul %166, %157, %cst_63 {dimension_numbers = #tpu.dot_dimension_numbers<[1], [0], [0], [1], [0, 0, 1, 1], [], []>} : vector<16x16xbf16>, vector<16x8xbf16>, vector<16x8xf32> -> vector<16x8xf32>
    %168 = tpu.reciprocal %165 {approx = true} : vector<16x1xf32> -> vector<16x1xf32>
    %169 = vector.broadcast %168 : vector<16x1xf32> to vector<16x8xf32>
    %170 = arith.mulf %167, %169 : vector<16x8xf32>
    %171 = arith.truncf %170 : vector<16x8xf32> to vector<16x8xbf16>
    %c3_64 = arith.constant 3 : index
    %c0_65 = arith.constant 0 : index
    %c0_66 = arith.constant 0 : index
    %172 = vector.load %arg3[%c3_64, %c0_65, %c0_66] : memref<5x8x32xbf16, #tpu.memory_space<vmem>>, vector<1x8x32xbf16>
    %173 = vector.shape_cast %172 : vector<1x8x32xbf16> to vector<8x32xbf16>
    %cst_67 = arith.constant dense<0.000000e+00> : vector<16x32xf32>
    %174 = tpu.matmul %171, %173, %cst_67 {dimension_numbers = #tpu.dot_dimension_numbers<[1], [0], [0], [1], [0, 0, 1, 1], [], []>} : vector<16x8xbf16>, vector<8x32xbf16>, vector<16x32xf32> -> vector<16x32xf32>
    %175 = arith.addf %154, %174 : vector<16x32xf32>
    %176 = vector.broadcast %6 : vector<1x32xf32> to vector<16x32xf32>
    %177 = arith.addf %175, %176 : vector<16x32xf32>
    %c16 = arith.constant 16 : index
    %c0_68 = arith.constant 0 : index
    %178 = vector.load %arg4[%c16, %c0_68] : memref<32x32xf32, #tpu.memory_space<vmem>>, vector<16x32xf32>
    tpu.vector_store %arg4[%c16, %c0_68], %177 {strides = array<i32>} : memref<32x32xf32, #tpu.memory_space<vmem>>, vector<16x32xf32>,
    return
  }
  func.func @transform_0(%arg0: i32) -> (i32, i32) {
    %c0_i32 = arith.constant 0 : i32
    %c0_i32_0 = arith.constant 0 : i32
    %c0_i32_1 = arith.constant 0 : i32
    return %c0_i32, %c0_i32_0 : i32, i32
  }
  func.func @transform_1(%arg0: i32) -> (i32, i32) {
    %c0_i32 = arith.constant 0 : i32
    %c0_i32_0 = arith.constant 0 : i32
    %c0_i32_1 = arith.constant 0 : i32
    return %c0_i32, %c0_i32_0 : i32, i32
  }
  func.func @transform_2(%arg0: i32) -> (i32, i32, i32) {
    %c0_i32 = arith.constant 0 : i32
    %c0_i32_0 = arith.constant 0 : i32
    %c0_i32_1 = arith.constant 0 : i32
    %c0_i32_2 = arith.constant 0 : i32
    return %c0_i32, %c0_i32_0, %c0_i32_1 : i32, i32, i32
  }
  func.func @transform_3(%arg0: i32) -> (i32, i32) {
    %c0_i32 = arith.constant 0 : i32
    %c0_i32_0 = arith.constant 0 : i32
    %c0_i32_1 = arith.constant 0 : i32
    return %c0_i32, %c0_i32_0 : i32, i32
  }
}

</mosaic_0001>

<llo_original>
// kernel: tpu_custom_call.1
$region0: #{tpu_custom_call.1}
  #allocation0 [shape = 'u32[]', space=smem, size = 0x4, offset = 0x4, fixed_abs, tag = 'smem constant byte address 0x4 - core index']
  #allocation1 [shape = 'u32[144,128]{1,0:T(1,128)}', space=vmem, size = 0x12000, scoped, tag = 'internal scratch']
  %s0 = inlined_call_operand.hbm [shape: bf16[32,32], index: 0, kind: input, shape index: {}]
  %s1 = inlined_call_operand.hbm [shape: bf16[32,96], index: 1, kind: input, shape index: {}]
  %s2 = inlined_call_operand.hbm [shape: bf16[5,8,32], index: 2, kind: input, shape index: {}]
  %s3 = inlined_call_operand.hbm [shape: f32[32,32], index: 3, kind: output, shape index: {}]
  %s4 = sld [smem:[#allocation0]]
  $region34: #{tpu_custom_call.1} parent=0
    _
  %s6 = ssub.s32 1, %s4
  %s7 = scalar_select 0, %s6, %s4
  $region1: #{tpu_custom_call.1} parent=0
    #allocation2 [shape = 'u8[8192]{0}', space=vmem, size = 0x2000, scoped, tag = 'input window, operand 0, single buffered']
    #allocation3 [shape = 's32[1]{0}', space=sflag, size = 0x4, scoped, tag = 'scoped memory for tpu_custom_call.1']
    #allocation4 [shape = 's32[1]{0}', space=sflag, size = 0x4, scoped, tag = 'scoped memory for tpu_custom_call.1']
    #allocation5 [shape = 'u8[8192]{0}', space=vmem, size = 0x2000, scoped, tag = 'input window, operand 1, single buffered']
    #allocation6 [shape = 's32[1]{0}', space=sflag, size = 0x4, scoped, tag = 'scoped memory for tpu_custom_call.1']
    #allocation7 [shape = 'u8[10240]{0}', space=vmem, size = 0x2800, scoped, tag = 'input window, operand 2, single buffered']
    #allocation8 [shape = 'u8[16384]{0}', space=vmem, size = 0x4000, scoped, tag = 'output window, operand 0, single buffered']
    %8 = vsyncpa [#allocation3], 0
    %9 = vsyncpa [#allocation6], 0
    %10 = vsyncpa [#allocation4], 0
    // Predicated region
    $region2: #{tpu_custom_call.1} parent=1 // pred_check
      _
    $region3: #{tpu_custom_call.1} parent=1 // pred_check_branch
      %12 = sbr.rel (0) target = $region5
    $region4: #{tpu_custom_call.1} parent=1 // pred_region
      %s14 = ssub.s32 256, 256
      %15 = vsyncadd [#allocation3], %s14
      %s16 = sshll.u32 [#allocation2], 4
      %s17 = int_to_ptr.vmem [resolvable:$true] %s16
      %22 = dma.hbm_to_vmem [thread:$0]  %s0, 256, %s17, [#allocation3], 64, 64, 4
    $region5: #{tpu_custom_call.1} parent=1 // pred_fallthru
      _
    // Predicated region
    $region6: #{tpu_custom_call.1} parent=1 // pred_check
      _
    $region7: #{tpu_custom_call.1} parent=1 // pred_check_branch
      %24 = sbr.rel (0) target = $region9
    $region8: #{tpu_custom_call.1} parent=1 // pred_region
      %s26 = ssub.s32 256, 256
      %27 = vsyncadd [#allocation6], %s26
      %s28 = sshll.u32 [#allocation5], 4
      %s29 = int_to_ptr.vmem [resolvable:$true] %s28
      %34 = dma.hbm_to_vmem [thread:$0]  %s1, 256, %s29, [#allocation6], 64, 64, 4
    $region9: #{tpu_custom_call.1} parent=1 // pred_fallthru
      _
    // Predicated region
    $region10: #{tpu_custom_call.1} parent=1 // pred_check
      _
    $region11: #{tpu_custom_call.1} parent=1 // pred_check_branch
      %36 = sbr.rel (0) target = $region13
    $region12: #{tpu_custom_call.1} parent=1 // pred_region
      %s38 = ssub.s32 320, 320
      %39 = vsyncadd [#allocation6], %s38
      %s40 = sshll.u32 [#allocation7], 4
      %s41 = int_to_ptr.vmem [resolvable:$true] %s40
      %46 = dma.hbm_to_vmem [thread:$0]  %s2, 320, %s41, [#allocation6], 64, 64, 4
    $region13: #{tpu_custom_call.1} parent=1 // pred_fallthru
      _
    // Predicated region
    $region14: #{tpu_custom_call.1} parent=1 // pred_check
      _
    $region15: #{tpu_custom_call.1} parent=1 // pred_check_branch
      %48 = sbr.rel (0) target = $region17
    $region16: #{tpu_custom_call.1} parent=1 // pred_region
      %49 = dma.done [#allocation3], 256
    $region17: #{tpu_custom_call.1} parent=1 // pred_fallthru
      _
    // Predicated region
    $region18: #{tpu_custom_call.1} parent=1 // pred_check
      _
    $region19: #{tpu_custom_call.1} parent=1 // pred_check_branch
      %51 = sbr.rel (0) target = $region21
    $region20: #{tpu_custom_call.1} parent=1 // pred_region
      %52 = dma.done [#allocation6], 256
    $region21: #{tpu_custom_call.1} parent=1 // pred_fallthru
      _
    // Predicated region
    $region22: #{tpu_custom_call.1} parent=1 // pred_check
      _
    $region23: #{tpu_custom_call.1} parent=1 // pred_check_branch
      %54 = sbr.rel (0) target = $region25
    $region24: #{tpu_custom_call.1} parent=1 // pred_region
      %55 = dma.done [#allocation6], 320
    $region25: #{tpu_custom_call.1} parent=1 // pred_fallthru
      _
    %v57 = vld [vmem:[#allocation2] sm:$0xf]
    %v58 = vld [vmem:[#allocation2 + $0x4] sm:$0xf]
    %v59 = vld [vmem:[#allocation2 + $0x8] sm:$0xf]
    %v60 = vld [vmem:[#allocation2 + $0xc] sm:$0xf]
    %v61 = vld [vmem:[#allocation5] sm:$0xf]
    %v62 = vld [vmem:[#allocation5 + $0x4] sm:$0xf]
    %v63 = vld [vmem:[#allocation5 + $0x8] sm:$0xf]
    %v64 = vld [vmem:[#allocation5 + $0xc] sm:$0xf]
    %v69 = vunpack.c.l.b16 %v57
    %v70 = vunpack.c.l.b16 %v58
    %v71 = vunpack.c.l.b16 %v59
    %v72 = vunpack.c.l.b16 %v60
    %v73 = vpack.c.b16 %v70, %v69
    %v74 = vpack.c.b16 %v72, %v71
    %v79 = vunpack.c.l.b16 %v61
    %v80 = vunpack.c.l.b16 %v62
    %v81 = vunpack.c.l.b16 %v63
    %v82 = vunpack.c.l.b16 %v64
    %v83 = vpack.c.b16 %v80, %v79
    %v84 = vpack.c.b16 %v82, %v81
    %vm87 = vcmask 261120
    %v89 = vsel %vm87, %v73, 0
    %v92 = vsel %vm87, %v74, 0
    %94 = vmatprep.subr.bf16.mxu0 0
    %95 = vmatpush1.bf16.msra.mxu0 %v83
    %96 = vmatprep.subr.bf16.mxu0 0
    %97 = vmatpush1.bf16.msra.mxu0 %v84
    %98 = vmatprep.subr.bf16.mxu0 0
    %99 = vmatpush1.bf16.msra.mxu0 0
    %100 = vmatprep.subr.bf16.mxu0 0
    %101 = vmatpush1.bf16.msra.mxu0 0
    %102 = vmatprep.subr.bf16.mxu0 0
    %103 = vmatpush1.bf16.msra.mxu0 0
    %104 = vmatprep.subr.bf16.mxu0 0
    %105 = vmatpush1.bf16.msra.mxu0 0
    %106 = vmatprep.subr.bf16.mxu0 0
    %107 = vmatpush1.bf16.msra.mxu0 0
    %108 = vmatprep.subr.bf16.mxu0 0
    %109 = vmatpush1.bf16.msra.mxu0 0
    %110 = vmatprep.subr.bf16.mxu0 0
    %111 = vmatpush1.bf16.msra.mxu0 0
    %112 = vmatprep.subr.bf16.mxu0 0
    %113 = vmatpush1.bf16.msra.mxu0 0
    %114 = vmatprep.subr.bf16.mxu0 0
    %115 = vmatpush1.bf16.msra.mxu0 0
    %116 = vmatprep.subr.bf16.mxu0 0
    %117 = vmatpush1.bf16.msra.mxu0 0
    %118 = vmatprep.subr.bf16.mxu0 0
    %119 = vmatpush1.bf16.msra.mxu0 0
    %120 = vmatprep.subr.bf16.mxu0 0
    %121 = vmatpush1.bf16.msra.mxu0 0
    %122 = vmatprep.subr.bf16.mxu0 0
    %123 = vmatpush1.bf16.msra.mxu0 0
    %124 = vmatprep.subr.bf16.mxu0 0
    %125 = vmatpush1.bf16.msra.mxu0 0
    %126 = vmatprep.mubr.bf16.mxu0 0
    %127 = vmatmul.mubr.bf16.gmra.mrb[0].mxu0 %v89
    %v128 = vpop.f32.mrb[0].mxu0
    %v129 = vadd.f32 0.0, %v128
    %v130 = vpop.f32.mrb[0].mxu0
    %v131 = vpop.f32.mrb[0].mxu0
    %v132 = vadd.f32 0.0, %v131
    %v133 = vpop.f32.mrb[0].mxu0
    %134 = vmatprep.mubr.bf16.mxu0 0
    %135 = vmatmul.mubr.bf16.gmra.mrb[0].mxu0 %v92
    %v136 = vpop.f32.mrb[0].mxu0
    %v137 = vadd.f32 0.0, %v136
    %v138 = vpop.f32.mrb[0].mxu0
    %v139 = vpop.f32.mrb[0].mxu0
    %v140 = vadd.f32 0.0, %v139
    %v141 = vpop.f32.mrb[0].mxu0
    %142 = vdwg.mxu0
    %v143 = vpack.c.bf16 %v132, %v129
    %v144 = vpack.c.bf16 %v140, %v137
    %s145 = scalar_lea.vmem [#allocation7], 16
    %v146 = vld [vmem:[%s145] sm:$0x1]
    %v147 = vunpack.c.l.bf16 %v146
    %149 = vrot.lane.b32.xlu0 %v143, 96
    %v150 = vpop.permute.xlu0 %149
    %vm151 = vcmask 64512
    %v153 = vsel %vm151, %v143, 0
    %v156 = vsel %vm151, %v150, 0
    %158 = vmatprep.subr.bf16.mxu0 0
    %159 = vmatpush1.bf16.xpose.msra.mxu0 %v156
    %160 = vmatprep.subr.bf16.mxu0 0
    %161 = vmatpush1.bf16.xpose.msra.mxu0 0
    %162 = vmatprep.subr.bf16.mxu0 0
    %163 = vmatpush1.bf16.xpose.msra.mxu0 0
    %164 = vmatprep.subr.bf16.mxu0 0
    %165 = vmatpush1.bf16.xpose.msra.mxu0 0
    %166 = vmatprep.subr.bf16.mxu0 0
    %167 = vmatpush1.bf16.xpose.msra.mxu0 0
    %168 = vmatprep.subr.bf16.mxu0 0
    %169 = vmatpush1.bf16.xpose.msra.mxu0 0
    %170 = vmatprep.subr.bf16.mxu0 0
    %171 = vmatpush1.bf16.xpose.msra.mxu0 0
    %172 = vmatprep.subr.bf16.mxu0 0
    %173 = vmatpush1.bf16.xpose.msra.mxu0 0
    %174 = vmatprep.subr.bf16.mxu0 0
    %175 = vmatpush1.bf16.xpose.msra.mxu0 0
    %176 = vmatprep.subr.bf16.mxu0 0
    %177 = vmatpush1.bf16.xpose.msra.mxu0 0
    %178 = vmatprep.subr.bf16.mxu0 0
    %179 = vmatpush1.bf16.xpose.msra.mxu0 0
    %180 = vmatprep.subr.bf16.mxu0 0
    %181 = vmatpush1.bf16.xpose.msra.mxu0 0
    %182 = vmatprep.subr.bf16.mxu0 0
    %183 = vmatpush1.bf16.xpose.msra.mxu0 0
    %184 = vmatprep.subr.bf16.mxu0 0
    %185 = vmatpush1.bf16.xpose.msra.mxu0 0
    %186 = vmatprep.subr.bf16.mxu0 0
    %187 = vmatpush1.bf16.xpose.msra.mxu0 0
    %188 = vmatprep.subr.bf16.mxu0 0
    %189 = vmatpush1.bf16.xpose.msra.mxu0 0
    %190 = vmatprep.mubr.bf16.mxu0 0
    %191 = vmatmul.mubr.bf16.gmra.mrb[0].mxu0 %v153
    %v192 = vpop.f32.mrb[0].mxu0
    %v193 = vadd.f32 0.0, %v192
    %v194 = vpop.f32.mrb[0].mxu0
    %v195 = vpop.f32.mrb[0].mxu0
    %v196 = vadd.f32 0.0, %v195
    %v197 = vpop.f32.mrb[0].mxu0
    %198 = vdwg.mxu0
    %vm199 = vcmask 130048
    %v200 = vsel %vm199, %v193, -inf
    %201 = vmax.xlane.f32.xlu0 %v200
    %v202 = vpop.xlane.xlu0 %201
    %v203 = vsel %vm199, %v196, -inf
    %204 = vmax.xlane.f32.xlu0 %v203
    %v205 = vpop.xlane.xlu0 %204
    %v206 = vsub.f32 %v193, %v202
    %v207 = vsub.f32 %v196, %v205
    %v208 = vmul.f32 %v206, 1.442695
    %v209 = vpow.pop %v208
    %v210 = vmul.f32 %v207, 1.442695
    %v211 = vpow.pop %v210
    %v212 = vsel %vm199, %v209, 0.0
    %213 = vadd.xlane.f32.xlu0 %v212
    %v214 = vpop.xlane.xlu0 %213
    %v215 = vsel %vm199, %v211, 0.0
    %216 = vadd.xlane.f32.xlu0 %v215
    %v217 = vpop.xlane.xlu0 %216
    %v218 = vpack.c.bf16 %v211, %v209
    %219 = vrot.lane.b32.xlu0 %v143, 64
    %v220 = vpop.permute.xlu0 %219
    %v223 = vsel %vm199, %v218, 0
    %225 = vmatprep.subr.bf16.mxu0 0
    %226 = vmatpush1.bf16.msra.mxu0 %v220
    %227 = vmatprep.subr.bf16.mxu0 0
    %228 = vmatpush1.bf16.msra.mxu0 0
    %229 = vmatprep.subr.bf16.mxu0 0
    %230 = vmatpush1.bf16.msra.mxu0 0
    %231 = vmatprep.subr.bf16.mxu0 0
    %232 = vmatpush1.bf16.msra.mxu0 0
    %233 = vmatprep.subr.bf16.mxu0 0
    %234 = vmatpush1.bf16.msra.mxu0 0
    %235 = vmatprep.subr.bf16.mxu0 0
    %236 = vmatpush1.bf16.msra.mxu0 0
    %237 = vmatprep.subr.bf16.mxu0 0
    %238 = vmatpush1.bf16.msra.mxu0 0
    %239 = vmatprep.subr.bf16.mxu0 0
    %240 = vmatpush1.bf16.msra.mxu0 0
    %241 = vmatprep.subr.bf16.mxu0 0
    %242 = vmatpush1.bf16.msra.mxu0 0
    %243 = vmatprep.subr.bf16.mxu0 0
    %244 = vmatpush1.bf16.msra.mxu0 0
    %245 = vmatprep.subr.bf16.mxu0 0
    %246 = vmatpush1.bf16.msra.mxu0 0
    %247 = vmatprep.subr.bf16.mxu0 0
    %248 = vmatpush1.bf16.msra.mxu0 0
    %249 = vmatprep.subr.bf16.mxu0 0
    %250 = vmatpush1.bf16.msra.mxu0 0
    %251 = vmatprep.subr.bf16.mxu0 0
    %252 = vmatpush1.bf16.msra.mxu0 0
    %253 = vmatprep.subr.bf16.mxu0 0
    %254 = vmatpush1.bf16.msra.mxu0 0
    %255 = vmatprep.subr.bf16.mxu0 0
    %256 = vmatpush1.bf16.msra.mxu0 0
    %257 = vmatprep.mubr.bf16.mxu0 0
    %258 = vmatmul.mubr.bf16.gmra.mrb[0].mxu0 %v223
    %v259 = vpop.f32.mrb[0].mxu0
    %v260 = vadd.f32 0.0, %v259
    %v261 = vpop.f32.mrb[0].mxu0
    %v262 = vpop.f32.mrb[0].mxu0
    %v263 = vadd.f32 0.0, %v262
    %v264 = vpop.f32.mrb[0].mxu0
    %265 = vdwg.mxu0
    %v266 = vrcp.pop %v214
    %v267 = vrcp.pop %v217
    %v268 = vmul.f32 %v260, %v266
    %v269 = vmul.f32 %v263, %v267
    %v270 = vpack.c.bf16 %v269, %v268
    %v271 = vld [vmem:[#allocation7] sm:$0xf]
    %272 = vrot.lane.b32.xlu0 %v143, 120
    %v273 = vpop.permute.xlu0 %272
    %274 = vrot.lane.b32.xlu0 %v143, 88
    %v275 = vpop.permute.xlu0 %274
    %v277 = vsel %vm151, %v273, 0
    %v280 = vsel %vm151, %v275, 0
    %282 = vmatprep.subr.bf16.mxu0 0
    %283 = vmatpush1.bf16.xpose.msra.mxu0 %v280
    %284 = vmatprep.subr.bf16.mxu0 0
    %285 = vmatpush1.bf16.xpose.msra.mxu0 0
    %286 = vmatprep.subr.bf16.mxu0 0
    %287 = vmatpush1.bf16.xpose.msra.mxu0 0
    %288 = vmatprep.subr.bf16.mxu0 0
    %289 = vmatpush1.bf16.xpose.msra.mxu0 0
    %290 = vmatprep.subr.bf16.mxu0 0
    %291 = vmatpush1.bf16.xpose.msra.mxu0 0
    %292 = vmatprep.subr.bf16.mxu0 0
    %293 = vmatpush1.bf16.xpose.msra.mxu0 0
    %294 = vmatprep.subr.bf16.mxu0 0
    %295 = vmatpush1.bf16.xpose.msra.mxu0 0
    %296 = vmatprep.subr.bf16.mxu0 0
    %297 = vmatpush1.bf16.xpose.msra.mxu0 0
    %298 = vmatprep.subr.bf16.mxu0 0
    %299 = vmatpush1.bf16.xpose.msra.mxu0 0
    %300 = vmatprep.subr.bf16.mxu0 0
    %301 = vmatpush1.bf16.xpose.msra.mxu0 0
    %302 = vmatprep.subr.bf16.mxu0 0
    %303 = vmatpush1.bf16.xpose.msra.mxu0 0
    %304 = vmatprep.subr.bf16.mxu0 0
    %305 = vmatpush1.bf16.xpose.msra.mxu0 0
    %306 = vmatprep.subr.bf16.mxu0 0
    %307 = vmatpush1.bf16.xpose.msra.mxu0 0
    %308 = vmatprep.subr.bf16.mxu0 0
    %309 = vmatpush1.bf16.xpose.msra.mxu0 0
    %310 = vmatprep.subr.bf16.mxu0 0
    %311 = vmatpush1.bf16.xpose.msra.mxu0 0
    %312 = vmatprep.subr.bf16.mxu0 0
    %313 = vmatpush1.bf16.xpose.msra.mxu0 0
    %314 = vmatprep.mubr.bf16.mxu0 0
    %315 = vmatmul.mubr.bf16.gmra.mrb[0].mxu0 %v277
    %v316 = vpop.f32.mrb[0].mxu0
    %v317 = vadd.f32 0.0, %v316
    %v318 = vpop.f32.mrb[0].mxu0
    %v319 = vpop.f32.mrb[0].mxu0
    %v320 = vadd.f32 0.0, %v319
    %v321 = vpop.f32.mrb[0].mxu0
    %322 = vdwg.mxu0
    %v323 = vsel %vm199, %v317, -inf
    %324 = vmax.xlane.f32.xlu0 %v323
    %v325 = vpop.xlane.xlu0 %324
    %v326 = vsel %vm199, %v320, -inf
    %327 = vmax.xlane.f32.xlu0 %v326
    %v328 = vpop.xlane.xlu0 %327
    %v329 = vsub.f32 %v317, %v325
    %v330 = vsub.f32 %v320, %v328
    %v331 = vmul.f32 %v329, 1.442695
    %v332 = vpow.pop %v331
    %v333 = vmul.f32 %v330, 1.442695
    %v334 = vpow.pop %v333
    %v335 = vsel %vm199, %v332, 0.0
    %336 = vadd.xlane.f32.xlu0 %v335
    %v337 = vpop.xlane.xlu0 %336
    %v338 = vsel %vm199, %v334, 0.0
    %339 = vadd.xlane.f32.xlu0 %v338
    %v340 = vpop.xlane.xlu0 %339
    %v341 = vpack.c.bf16 %v334, %v332
    %342 = vrot.lane.b32.xlu0 %v143, 56
    %v343 = vpop.permute.xlu0 %342
    %v346 = vsel %vm199, %v341, 0
    %348 = vmatprep.subr.bf16.mxu0 0
    %349 = vmatpush1.bf16.msra.mxu0 %v343
    %350 = vmatprep.subr.bf16.mxu0 0
    %351 = vmatpush1.bf16.msra.mxu0 0
    %352 = vmatprep.subr.bf16.mxu0 0
    %353 = vmatpush1.bf16.msra.mxu0 0
    %354 = vmatprep.subr.bf16.mxu0 0
    %355 = vmatpush1.bf16.msra.mxu0 0
    %356 = vmatprep.subr.bf16.mxu0 0
    %357 = vmatpush1.bf16.msra.mxu0 0
    %358 = vmatprep.subr.bf16.mxu0 0
    %359 = vmatpush1.bf16.msra.mxu0 0
    %360 = vmatprep.subr.bf16.mxu0 0
    %361 = vmatpush1.bf16.msra.mxu0 0
    %362 = vmatprep.subr.bf16.mxu0 0
    %363 = vmatpush1.bf16.msra.mxu0 0
    %364 = vmatprep.subr.bf16.mxu0 0
    %365 = vmatpush1.bf16.msra.mxu0 0
    %366 = vmatprep.subr.bf16.mxu0 0
    %367 = vmatpush1.bf16.msra.mxu0 0
    %368 = vmatprep.subr.bf16.mxu0 0
    %369 = vmatpush1.bf16.msra.mxu0 0
    %370 = vmatprep.subr.bf16.mxu0 0
    %371 = vmatpush1.bf16.msra.mxu0 0
    %372 = vmatprep.subr.bf16.mxu0 0
    %373 = vmatpush1.bf16.msra.mxu0 0
    %374 = vmatprep.subr.bf16.mxu0 0
    %375 = vmatpush1.bf16.msra.mxu0 0
    %376 = vmatprep.subr.bf16.mxu0 0
    %377 = vmatpush1.bf16.msra.mxu0 0
    %378 = vmatprep.subr.bf16.mxu0 0
    %379 = vmatpush1.bf16.msra.mxu0 0
    %380 = vmatprep.mubr.bf16.mxu0 0
    %381 = vmatmul.mubr.bf16.gmra.mrb[0].mxu0 %v346
    %v382 = vpop.f32.mrb[0].mxu0
    %v383 = vadd.f32 0.0, %v382
    %v384 = vpop.f32.mrb[0].mxu0
    %v385 = vpop.f32.mrb[0].mxu0
    %v386 = vadd.f32 0.0, %v385
    %v387 = vpop.f32.mrb[0].mxu0
    %388 = vdwg.mxu0
    %v389 = vrcp.pop %v337
    %v390 = vrcp.pop %v340
    %v391 = vmul.f32 %v383, %v389
    %v392 = vmul.f32 %v386, %v390
    %v393 = vpack.c.bf16 %v392, %v391
    %s394 = scalar_lea.vmem [#allocation7], 4
    %v395 = vld [vmem:[%s394] sm:$0xf]
    %v397 = vsel %vm151, %v393, 0
    %vm399 = vcmask 1043456
    %v401 = vsel %vm399, %v395, 0
    %403 = vmatprep.subr.bf16.mxu0 0
    %404 = vmatpush1.bf16.msra.mxu0 %v401
    %405 = vmatprep.subr.bf16.mxu0 0
    %406 = vmatpush1.bf16.msra.mxu0 0
    %407 = vmatprep.subr.bf16.mxu0 0
    %408 = vmatpush1.bf16.msra.mxu0 0
    %409 = vmatprep.subr.bf16.mxu0 0
    %410 = vmatpush1.bf16.msra.mxu0 0
    %411 = vmatprep.subr.bf16.mxu0 0
    %412 = vmatpush1.bf16.msra.mxu0 0
    %413 = vmatprep.subr.bf16.mxu0 0
    %414 = vmatpush1.bf16.msra.mxu0 0
    %415 = vmatprep.subr.bf16.mxu0 0
    %416 = vmatpush1.bf16.msra.mxu0 0
    %417 = vmatprep.subr.bf16.mxu0 0
    %418 = vmatpush1.bf16.msra.mxu0 0
    %419 = vmatprep.subr.bf16.mxu0 0
    %420 = vmatpush1.bf16.msra.mxu0 0
    %421 = vmatprep.subr.bf16.mxu0 0
    %422 = vmatpush1.bf16.msra.mxu0 0
    %423 = vmatprep.subr.bf16.mxu0 0
    %424 = vmatpush1.bf16.msra.mxu0 0
    %425 = vmatprep.subr.bf16.mxu0 0
    %426 = vmatpush1.bf16.msra.mxu0 0
    %427 = vmatprep.subr.bf16.mxu0 0
    %428 = vmatpush1.bf16.msra.mxu0 0
    %429 = vmatprep.subr.bf16.mxu0 0
    %430 = vmatpush1.bf16.msra.mxu0 0
    %431 = vmatprep.subr.bf16.mxu0 0
    %432 = vmatpush1.bf16.msra.mxu0 0
    %433 = vmatprep.subr.bf16.mxu0 0
    %434 = vmatpush1.bf16.msra.mxu0 0
    %435 = vmatprep.mubr.bf16.mxu0 0
    %436 = vmatmul.mubr.bf16.gmra.mrb[0].mxu0 %v397
    %v437 = vpop.f32.mrb[0].mxu0
    %v438 = vadd.f32 0.0, %v437
    %v439 = vpop.f32.mrb[0].mxu0
    %v440 = vpop.f32.mrb[0].mxu0
    %v441 = vadd.f32 0.0, %v440
    %v442 = vpop.f32.mrb[0].mxu0
    %443 = vdwg.mxu0
    %v445 = vsel %vm151, %v270, 0
    %v448 = vsel %vm399, %v271, 0
    %450 = vmatprep.subr.bf16.mxu0 0
    %451 = vmatpush1.bf16.msra.mxu0 %v448
    %452 = vmatprep.subr.bf16.mxu0 0
    %453 = vmatpush1.bf16.msra.mxu0 0
    %454 = vmatprep.subr.bf16.mxu0 0
    %455 = vmatpush1.bf16.msra.mxu0 0
    %456 = vmatprep.subr.bf16.mxu0 0
    %457 = vmatpush1.bf16.msra.mxu0 0
    %458 = vmatprep.subr.bf16.mxu0 0
    %459 = vmatpush1.bf16.msra.mxu0 0
    %460 = vmatprep.subr.bf16.mxu0 0
    %461 = vmatpush1.bf16.msra.mxu0 0
    %462 = vmatprep.subr.bf16.mxu0 0
    %463 = vmatpush1.bf16.msra.mxu0 0
    %464 = vmatprep.subr.bf16.mxu0 0
    %465 = vmatpush1.bf16.msra.mxu0 0
    %466 = vmatprep.subr.bf16.mxu0 0
    %467 = vmatpush1.bf16.msra.mxu0 0
    %468 = vmatprep.subr.bf16.mxu0 0
    %469 = vmatpush1.bf16.msra.mxu0 0
    %470 = vmatprep.subr.bf16.mxu0 0
    %471 = vmatpush1.bf16.msra.mxu0 0
    %472 = vmatprep.subr.bf16.mxu0 0
    %473 = vmatpush1.bf16.msra.mxu0 0
    %474 = vmatprep.subr.bf16.mxu0 0
    %475 = vmatpush1.bf16.msra.mxu0 0
    %476 = vmatprep.subr.bf16.mxu0 0
    %477 = vmatpush1.bf16.msra.mxu0 0
    %478 = vmatprep.subr.bf16.mxu0 0
    %479 = vmatpush1.bf16.msra.mxu0 0
    %480 = vmatprep.subr.bf16.mxu0 0
    %481 = vmatpush1.bf16.msra.mxu0 0
    %482 = vmatprep.mubr.bf16.mxu0 0
    %483 = vmatmul.mubr.bf16.gmra.mrb[0].mxu0 %v445
    %v484 = vpop.f32.mrb[0].mxu0
    %v485 = vadd.f32 %v438, %v484
    %v486 = vpop.f32.mrb[0].mxu0
    %v487 = vpop.f32.mrb[0].mxu0
    %v488 = vadd.f32 %v441, %v487
    %v489 = vpop.f32.mrb[0].mxu0
    %490 = vdwg.mxu0
    %491 = vrot.lane.b32.xlu0 %v143, 112
    %v492 = vpop.permute.xlu0 %491
    %493 = vrot.lane.b32.xlu0 %v143, 80
    %v494 = vpop.permute.xlu0 %493
    %v496 = vsel %vm151, %v492, 0
    %v499 = vsel %vm151, %v494, 0
    %501 = vmatprep.subr.bf16.mxu0 0
    %502 = vmatpush1.bf16.xpose.msra.mxu0 %v499
    %503 = vmatprep.subr.bf16.mxu0 0
    %504 = vmatpush1.bf16.xpose.msra.mxu0 0
    %505 = vmatprep.subr.bf16.mxu0 0
    %506 = vmatpush1.bf16.xpose.msra.mxu0 0
    %507 = vmatprep.subr.bf16.mxu0 0
    %508 = vmatpush1.bf16.xpose.msra.mxu0 0
    %509 = vmatprep.subr.bf16.mxu0 0
    %510 = vmatpush1.bf16.xpose.msra.mxu0 0
    %511 = vmatprep.subr.bf16.mxu0 0
    %512 = vmatpush1.bf16.xpose.msra.mxu0 0
    %513 = vmatprep.subr.bf16.mxu0 0
    %514 = vmatpush1.bf16.xpose.msra.mxu0 0
    %515 = vmatprep.subr.bf16.mxu0 0
    %516 = vmatpush1.bf16.xpose.msra.mxu0 0
    %517 = vmatprep.subr.bf16.mxu0 0
    %518 = vmatpush1.bf16.xpose.msra.mxu0 0
    %519 = vmatprep.subr.bf16.mxu0 0
    %520 = vmatpush1.bf16.xpose.msra.mxu0 0
    %521 = vmatprep.subr.bf16.mxu0 0
    %522 = vmatpush1.bf16.xpose.msra.mxu0 0
    %523 = vmatprep.subr.bf16.mxu0 0
    %524 = vmatpush1.bf16.xpose.msra.mxu0 0
    %525 = vmatprep.subr.bf16.mxu0 0
    %526 = vmatpush1.bf16.xpose.msra.mxu0 0
    %527 = vmatprep.subr.bf16.mxu0 0
    %528 = vmatpush1.bf16.xpose.msra.mxu0 0
    %529 = vmatprep.subr.bf16.mxu0 0
    %530 = vmatpush1.bf16.xpose.msra.mxu0 0
    %531 = vmatprep.subr.bf16.mxu0 0
    %532 = vmatpush1.bf16.xpose.msra.mxu0 0
    %533 = vmatprep.mubr.bf16.mxu0 0
    %534 = vmatmul.mubr.bf16.gmra.mrb[0].mxu0 %v496
    %v535 = vpop.f32.mrb[0].mxu0
    %v536 = vadd.f32 0.0, %v535
    %v537 = vpop.f32.mrb[0].mxu0
    %v538 = vpop.f32.mrb[0].mxu0
    %v539 = vadd.f32 0.0, %v538
    %v540 = vpop.f32.mrb[0].mxu0
    %541 = vdwg.mxu0
    %v542 = vsel %vm199, %v536, -inf
    %543 = vmax.xlane.f32.xlu0 %v542
    %v544 = vpop.xlane.xlu0 %543
    %v545 = vsel %vm199, %v539, -inf
    %546 = vmax.xlane.f32.xlu0 %v545
    %v547 = vpop.xlane.xlu0 %546
    %v548 = vsub.f32 %v536, %v544
    %v549 = vsub.f32 %v539, %v547
    %v550 = vmul.f32 %v548, 1.442695
    %v551 = vpow.pop %v550
    %v552 = vmul.f32 %v549, 1.442695
    %v553 = vpow.pop %v552
    %v554 = vsel %vm199, %v551, 0.0
    %555 = vadd.xlane.f32.xlu0 %v554
    %v556 = vpop.xlane.xlu0 %555
    %v557 = vsel %vm199, %v553, 0.0
    %558 = vadd.xlane.f32.xlu0 %v557
    %v559 = vpop.xlane.xlu0 %558
    %v560 = vpack.c.bf16 %v553, %v551
    %561 = vrot.lane.b32.xlu0 %v143, 48
    %v562 = vpop.permute.xlu0 %561
    %v565 = vsel %vm199, %v560, 0
    %567 = vmatprep.subr.bf16.mxu0 0
    %568 = vmatpush1.bf16.msra.mxu0 %v562
    %569 = vmatprep.subr.bf16.mxu0 0
    %570 = vmatpush1.bf16.msra.mxu0 0
    %571 = vmatprep.subr.bf16.mxu0 0
    %572 = vmatpush1.bf16.msra.mxu0 0
    %573 = vmatprep.subr.bf16.mxu0 0
    %574 = vmatpush1.bf16.msra.mxu0 0
    %575 = vmatprep.subr.bf16.mxu0 0
    %576 = vmatpush1.bf16.msra.mxu0 0
    %577 = vmatprep.subr.bf16.mxu0 0
    %578 = vmatpush1.bf16.msra.mxu0 0
    %579 = vmatprep.subr.bf16.mxu0 0
    %580 = vmatpush1.bf16.msra.mxu0 0
    %581 = vmatprep.subr.bf16.mxu0 0
    %582 = vmatpush1.bf16.msra.mxu0 0
    %583 = vmatprep.subr.bf16.mxu0 0
    %584 = vmatpush1.bf16.msra.mxu0 0
    %585 = vmatprep.subr.bf16.mxu0 0
    %586 = vmatpush1.bf16.msra.mxu0 0
    %587 = vmatprep.subr.bf16.mxu0 0
    %588 = vmatpush1.bf16.msra.mxu0 0
    %589 = vmatprep.subr.bf16.mxu0 0
    %590 = vmatpush1.bf16.msra.mxu0 0
    %591 = vmatprep.subr.bf16.mxu0 0
    %592 = vmatpush1.bf16.msra.mxu0 0
    %593 = vmatprep.subr.bf16.mxu0 0
    %594 = vmatpush1.bf16.msra.mxu0 0
    %595 = vmatprep.subr.bf16.mxu0 0
    %596 = vmatpush1.bf16.msra.mxu0 0
    %597 = vmatprep.subr.bf16.mxu0 0
    %598 = vmatpush1.bf16.msra.mxu0 0
    %599 = vmatprep.mubr.bf16.mxu0 0
    %600 = vmatmul.mubr.bf16.gmra.mrb[0].mxu0 %v565
    %v601 = vpop.f32.mrb[0].mxu0
    %v602 = vadd.f32 0.0, %v601
    %v603 = vpop.f32.mrb[0].mxu0
    %v604 = vpop.f32.mrb[0].mxu0
    %v605 = vadd.f32 0.0, %v604
    %v606 = vpop.f32.mrb[0].mxu0
    %607 = vdwg.mxu0
    %v608 = vrcp.pop %v556
    %v609 = vrcp.pop %v559
    %v610 = vmul.f32 %v602, %v608
    %v611 = vmul.f32 %v605, %v609
    %v612 = vpack.c.bf16 %v611, %v610
    %s613 = scalar_lea.vmem [#allocation7], 8
    %v614 = vld [vmem:[%s613] sm:$0xf]
    %v616 = vsel %vm151, %v612, 0
    %v619 = vsel %vm399, %v614, 0
    %621 = vmatprep.subr.bf16.mxu0 0
    %622 = vmatpush1.bf16.msra.mxu0 %v619
    %623 = vmatprep.subr.bf16.mxu0 0
    %624 = vmatpush1.bf16.msra.mxu0 0
    %625 = vmatprep.subr.bf16.mxu0 0
    %626 = vmatpush1.bf16.msra.mxu0 0
    %627 = vmatprep.subr.bf16.mxu0 0
    %628 = vmatpush1.bf16.msra.mxu0 0
    %629 = vmatprep.subr.bf16.mxu0 0
    %630 = vmatpush1.bf16.msra.mxu0 0
    %631 = vmatprep.subr.bf16.mxu0 0
    %632 = vmatpush1.bf16.msra.mxu0 0
    %633 = vmatprep.subr.bf16.mxu0 0
    %634 = vmatpush1.bf16.msra.mxu0 0
    %635 = vmatprep.subr.bf16.mxu0 0
    %636 = vmatpush1.bf16.msra.mxu0 0
    %637 = vmatprep.subr.bf16.mxu0 0
    %638 = vmatpush1.bf16.msra.mxu0 0
    %639 = vmatprep.subr.bf16.mxu0 0
    %640 = vmatpush1.bf16.msra.mxu0 0
    %641 = vmatprep.subr.bf16.mxu0 0
    %642 = vmatpush1.bf16.msra.mxu0 0
    %643 = vmatprep.subr.bf16.mxu0 0
    %644 = vmatpush1.bf16.msra.mxu0 0
    %645 = vmatprep.subr.bf16.mxu0 0
    %646 = vmatpush1.bf16.msra.mxu0 0
    %647 = vmatprep.subr.bf16.mxu0 0
    %648 = vmatpush1.bf16.msra.mxu0 0
    %649 = vmatprep.subr.bf16.mxu0 0
    %650 = vmatpush1.bf16.msra.mxu0 0
    %651 = vmatprep.subr.bf16.mxu0 0
    %652 = vmatpush1.bf16.msra.mxu0 0
    %653 = vmatprep.mubr.bf16.mxu0 0
    %654 = vmatmul.mubr.bf16.gmra.mrb[0].mxu0 %v616
    %v655 = vpop.f32.mrb[0].mxu0
    %v656 = vadd.f32 0.0, %v655
    %v657 = vpop.f32.mrb[0].mxu0
    %v658 = vpop.f32.mrb[0].mxu0
    %v659 = vadd.f32 0.0, %v658
    %v660 = vpop.f32.mrb[0].mxu0
    %661 = vdwg.mxu0
    %v662 = vadd.f32 %v485, %v656
    %v663 = vadd.f32 %v488, %v659
    %664 = vrot.lane.b32.xlu0 %v143, 104
    %v665 = vpop.permute.xlu0 %664
    %666 = vrot.lane.b32.xlu0 %v143, 72
    %v667 = vpop.permute.xlu0 %666
    %v669 = vsel %vm151, %v665, 0
    %v672 = vsel %vm151, %v667, 0
    %674 = vmatprep.subr.bf16.mxu0 0
    %675 = vmatpush1.bf16.xpose.msra.mxu0 %v672
    %676 = vmatprep.subr.bf16.mxu0 0
    %677 = vmatpush1.bf16.xpose.msra.mxu0 0
    %678 = vmatprep.subr.bf16.mxu0 0
    %679 = vmatpush1.bf16.xpose.msra.mxu0 0
    %680 = vmatprep.subr.bf16.mxu0 0
    %681 = vmatpush1.bf16.xpose.msra.mxu0 0
    %682 = vmatprep.subr.bf16.mxu0 0
    %683 = vmatpush1.bf16.xpose.msra.mxu0 0
    %684 = vmatprep.subr.bf16.mxu0 0
    %685 = vmatpush1.bf16.xpose.msra.mxu0 0
    %686 = vmatprep.subr.bf16.mxu0 0
    %687 = vmatpush1.bf16.xpose.msra.mxu0 0
    %688 = vmatprep.subr.bf16.mxu0 0
    %689 = vmatpush1.bf16.xpose.msra.mxu0 0
    %690 = vmatprep.subr.bf16.mxu0 0
    %691 = vmatpush1.bf16.xpose.msra.mxu0 0
    %692 = vmatprep.subr.bf16.mxu0 0
    %693 = vmatpush1.bf16.xpose.msra.mxu0 0
    %694 = vmatprep.subr.bf16.mxu0 0
    %695 = vmatpush1.bf16.xpose.msra.mxu0 0
    %696 = vmatprep.subr.bf16.mxu0 0
    %697 = vmatpush1.bf16.xpose.msra.mxu0 0
    %698 = vmatprep.subr.bf16.mxu0 0
    %699 = vmatpush1.bf16.xpose.msra.mxu0 0
    %700 = vmatprep.subr.bf16.mxu0 0
    %701 = vmatpush1.bf16.xpose.msra.mxu0 0
    %702 = vmatprep.subr.bf16.mxu0 0
    %703 = vmatpush1.bf16.xpose.msra.mxu0 0
    %704 = vmatprep.subr.bf16.mxu0 0
    %705 = vmatpush1.bf16.xpose.msra.mxu0 0
    %706 = vmatprep.mubr.bf16.mxu0 0
    %707 = vmatmul.mubr.bf16.gmra.mrb[0].mxu0 %v669
    %v708 = vpop.f32.mrb[0].mxu0
    %v709 = vadd.f32 0.0, %v708
    %v710 = vpop.f32.mrb[0].mxu0
    %v711 = vpop.f32.mrb[0].mxu0
    %v712 = vadd.f32 0.0, %v711
    %v713 = vpop.f32.mrb[0].mxu0
    %714 = vdwg.mxu0
    %v715 = vsel %vm199, %v709, -inf
    %716 = vmax.xlane.f32.xlu0 %v715
    %v717 = vpop.xlane.xlu0 %716
    %v718 = vsel %vm199, %v712, -inf
    %719 = vmax.xlane.f32.xlu0 %v718
    %v720 = vpop.xlane.xlu0 %719
    %v721 = vsub.f32 %v709, %v717
    %v722 = vsub.f32 %v712, %v720
    %v723 = vmul.f32 %v721, 1.442695
    %v724 = vpow.pop %v723
    %v725 = vmul.f32 %v722, 1.442695
    %v726 = vpow.pop %v725
    %v727 = vsel %vm199, %v724, 0.0
    %728 = vadd.xlane.f32.xlu0 %v727
    %v729 = vpop.xlane.xlu0 %728
    %v730 = vsel %vm199, %v726, 0.0
    %731 = vadd.xlane.f32.xlu0 %v730
    %v732 = vpop.xlane.xlu0 %731
    %v733 = vpack.c.bf16 %v726, %v724
    %734 = vrot.lane.b32.xlu0 %v143, 40
    %v735 = vpop.permute.xlu0 %734
    %v738 = vsel %vm199, %v733, 0
    %740 = vmatprep.subr.bf16.mxu0 0
    %741 = vmatpush1.bf16.msra.mxu0 %v735
    %742 = vmatprep.subr.bf16.mxu0 0
    %743 = vmatpush1.bf16.msra.mxu0 0
    %744 = vmatprep.subr.bf16.mxu0 0
    %745 = vmatpush1.bf16.msra.mxu0 0
    %746 = vmatprep.subr.bf16.mxu0 0
    %747 = vmatpush1.bf16.msra.mxu0 0
    %748 = vmatprep.subr.bf16.mxu0 0
    %749 = vmatpush1.bf16.msra.mxu0 0
    %750 = vmatprep.subr.bf16.mxu0 0
    %751 = vmatpush1.bf16.msra.mxu0 0
    %752 = vmatprep.subr.bf16.mxu0 0
    %753 = vmatpush1.bf16.msra.mxu0 0
    %754 = vmatprep.subr.bf16.mxu0 0
    %755 = vmatpush1.bf16.msra.mxu0 0
    %756 = vmatprep.subr.bf16.mxu0 0
    %757 = vmatpush1.bf16.msra.mxu0 0
    %758 = vmatprep.subr.bf16.mxu0 0
    %759 = vmatpush1.bf16.msra.mxu0 0
    %760 = vmatprep.subr.bf16.mxu0 0
    %761 = vmatpush1.bf16.msra.mxu0 0
    %762 = vmatprep.subr.bf16.mxu0 0
    %763 = vmatpush1.bf16.msra.mxu0 0
    %764 = vmatprep.subr.bf16.mxu0 0
    %765 = vmatpush1.bf16.msra.mxu0 0
    %766 = vmatprep.subr.bf16.mxu0 0
    %767 = vmatpush1.bf16.msra.mxu0 0
    %768 = vmatprep.subr.bf16.mxu0 0
    %769 = vmatpush1.bf16.msra.mxu0 0
    %770 = vmatprep.subr.bf16.mxu0 0
    %771 = vmatpush1.bf16.msra.mxu0 0
    %772 = vmatprep.mubr.bf16.mxu0 0
    %773 = vmatmul.mubr.bf16.gmra.mrb[0].mxu0 %v738
    %v774 = vpop.f32.mrb[0].mxu0
    %v775 = vadd.f32 0.0, %v774
    %v776 = vpop.f32.mrb[0].mxu0
    %v777 = vpop.f32.mrb[0].mxu0
    %v778 = vadd.f32 0.0, %v777
    %v779 = vpop.f32.mrb[0].mxu0
    %780 = vdwg.mxu0
    %v781 = vrcp.pop %v729
    %v782 = vrcp.pop %v732
    %v783 = vmul.f32 %v775, %v781
    %v784 = vmul.f32 %v778, %v782
    %v785 = vpack.c.bf16 %v784, %v783
    %s786 = scalar_lea.vmem [#allocation7], 12
    %v787 = vld [vmem:[%s786] sm:$0xf]
    %v789 = vsel %vm151, %v785, 0
    %v792 = vsel %vm399, %v787, 0
    %794 = vmatprep.subr.bf16.mxu0 0
    %795 = vmatpush1.bf16.msra.mxu0 %v792
    %796 = vmatprep.subr.bf16.mxu0 0
    %797 = vmatpush1.bf16.msra.mxu0 0
    %798 = vmatprep.subr.bf16.mxu0 0
    %799 = vmatpush1.bf16.msra.mxu0 0
    %800 = vmatprep.subr.bf16.mxu0 0
    %801 = vmatpush1.bf16.msra.mxu0 0
    %802 = vmatprep.subr.bf16.mxu0 0
    %803 = vmatpush1.bf16.msra.mxu0 0
    %804 = vmatprep.subr.bf16.mxu0 0
    %805 = vmatpush1.bf16.msra.mxu0 0
    %806 = vmatprep.subr.bf16.mxu0 0
    %807 = vmatpush1.bf16.msra.mxu0 0
    %808 = vmatprep.subr.bf16.mxu0 0
    %809 = vmatpush1.bf16.msra.mxu0 0
    %810 = vmatprep.subr.bf16.mxu0 0
    %811 = vmatpush1.bf16.msra.mxu0 0
    %812 = vmatprep.subr.bf16.mxu0 0
    %813 = vmatpush1.bf16.msra.mxu0 0
    %814 = vmatprep.subr.bf16.mxu0 0
    %815 = vmatpush1.bf16.msra.mxu0 0
    %816 = vmatprep.subr.bf16.mxu0 0
    %817 = vmatpush1.bf16.msra.mxu0 0
    %818 = vmatprep.subr.bf16.mxu0 0
    %819 = vmatpush1.bf16.msra.mxu0 0
    %820 = vmatprep.subr.bf16.mxu0 0
    %821 = vmatpush1.bf16.msra.mxu0 0
    %822 = vmatprep.subr.bf16.mxu0 0
    %823 = vmatpush1.bf16.msra.mxu0 0
    %824 = vmatprep.subr.bf16.mxu0 0
    %825 = vmatpush1.bf16.msra.mxu0 0
    %826 = vmatprep.mubr.bf16.mxu0 0
    %827 = vmatmul.mubr.bf16.gmra.mrb[0].mxu0 %v789
    %v828 = vpop.f32.mrb[0].mxu0
    %v829 = vadd.f32 0.0, %v828
    %v830 = vpop.f32.mrb[0].mxu0
    %v831 = vpop.f32.mrb[0].mxu0
    %v832 = vadd.f32 0.0, %v831
    %v833 = vpop.f32.mrb[0].mxu0
    %834 = vdwg.mxu0
    %v835 = vadd.f32 %v662, %v829
    %v836 = vadd.f32 %v663, %v832
    %v837 = vlaneseq
    %v838 = vshrl.u32 %v837, 7
    %v839 = vsub.s32 0, %v838
    %v840 = vrot.slane %v147, %v839
    %v841 = vadd.f32 %v835, %v840
    %v842 = vadd.f32 %v836, %v840
    %843 = vst.msk [vmem:[#allocation8] sm:$0xff] %vm87, %v841
    %844 = vst.msk [vmem:[#allocation8 + $0x8] sm:$0xff] %vm87, %v842
    %846 = vrot.lane.b32.xlu0 %v144, 96
    %v847 = vpop.permute.xlu0 %846
    %v849 = vsel %vm151, %v144, 0
    %v852 = vsel %vm151, %v847, 0
    %854 = vmatprep.subr.bf16.mxu0 0
    %855 = vmatpush1.bf16.xpose.msra.mxu0 %v852
    %856 = vmatprep.subr.bf16.mxu0 0
    %857 = vmatpush1.bf16.xpose.msra.mxu0 0
    %858 = vmatprep.subr.bf16.mxu0 0
    %859 = vmatpush1.bf16.xpose.msra.mxu0 0
    %860 = vmatprep.subr.bf16.mxu0 0
    %861 = vmatpush1.bf16.xpose.msra.mxu0 0
    %862 = vmatprep.subr.bf16.mxu0 0
    %863 = vmatpush1.bf16.xpose.msra.mxu0 0
    %864 = vmatprep.subr.bf16.mxu0 0
    %865 = vmatpush1.bf16.xpose.msra.mxu0 0
    %866 = vmatprep.subr.bf16.mxu0 0
    %867 = vmatpush1.bf16.xpose.msra.mxu0 0
    %868 = vmatprep.subr.bf16.mxu0 0
    %869 = vmatpush1.bf16.xpose.msra.mxu0 0
    %870 = vmatprep.subr.bf16.mxu0 0
    %871 = vmatpush1.bf16.xpose.msra.mxu0 0
    %872 = vmatprep.subr.bf16.mxu0 0
    %873 = vmatpush1.bf16.xpose.msra.mxu0 0
    %874 = vmatprep.subr.bf16.mxu0 0
    %875 = vmatpush1.bf16.xpose.msra.mxu0 0
    %876 = vmatprep.subr.bf16.mxu0 0
    %877 = vmatpush1.bf16.xpose.msra.mxu0 0
    %878 = vmatprep.subr.bf16.mxu0 0
    %879 = vmatpush1.bf16.xpose.msra.mxu0 0
    %880 = vmatprep.subr.bf16.mxu0 0
    %881 = vmatpush1.bf16.xpose.msra.mxu0 0
    %882 = vmatprep.subr.bf16.mxu0 0
    %883 = vmatpush1.bf16.xpose.msra.mxu0 0
    %884 = vmatprep.subr.bf16.mxu0 0
    %885 = vmatpush1.bf16.xpose.msra.mxu0 0
    %886 = vmatprep.mubr.bf16.mxu0 0
    %887 = vmatmul.mubr.bf16.gmra.mrb[0].mxu0 %v849
    %v888 = vpop.f32.mrb[0].mxu0
    %v889 = vadd.f32 0.0, %v888
    %v890 = vpop.f32.mrb[0].mxu0
    %v891 = vpop.f32.mrb[0].mxu0
    %v892 = vadd.f32 0.0, %v891
    %v893 = vpop.f32.mrb[0].mxu0
    %894 = vdwg.mxu0
    %v895 = vsel %vm199, %v889, -inf
    %896 = vmax.xlane.f32.xlu0 %v895
    %v897 = vpop.xlane.xlu0 %896
    %v898 = vsel %vm199, %v892, -inf
    %899 = vmax.xlane.f32.xlu0 %v898
    %v900 = vpop.xlane.xlu0 %899
    %v901 = vsub.f32 %v889, %v897
    %v902 = vsub.f32 %v892, %v900
    %v903 = vmul.f32 %v901, 1.442695
    %v904 = vpow.pop %v903
    %v905 = vmul.f32 %v902, 1.442695
    %v906 = vpow.pop %v905
    %v907 = vsel %vm199, %v904, 0.0
    %908 = vadd.xlane.f32.xlu0 %v907
    %v909 = vpop.xlane.xlu0 %908
    %v910 = vsel %vm199, %v906, 0.0
    %911 = vadd.xlane.f32.xlu0 %v910
    %v912 = vpop.xlane.xlu0 %911
    %v913 = vpack.c.bf16 %v906, %v904
    %914 = vrot.lane.b32.xlu0 %v144, 64
    %v915 = vpop.permute.xlu0 %914
    %v918 = vsel %vm199, %v913, 0
    %920 = vmatprep.subr.bf16.mxu0 0
    %921 = vmatpush1.bf16.msra.mxu0 %v915
    %922 = vmatprep.subr.bf16.mxu0 0
    %923 = vmatpush1.bf16.msra.mxu0 0
    %924 = vmatprep.subr.bf16.mxu0 0
    %925 = vmatpush1.bf16.msra.mxu0 0
    %926 = vmatprep.subr.bf16.mxu0 0
    %927 = vmatpush1.bf16.msra.mxu0 0
    %928 = vmatprep.subr.bf16.mxu0 0
    %929 = vmatpush1.bf16.msra.mxu0 0
    %930 = vmatprep.subr.bf16.mxu0 0
    %931 = vmatpush1.bf16.msra.mxu0 0
    %932 = vmatprep.subr.bf16.mxu0 0
    %933 = vmatpush1.bf16.msra.mxu0 0
    %934 = vmatprep.subr.bf16.mxu0 0
    %935 = vmatpush1.bf16.msra.mxu0 0
    %936 = vmatprep.subr.bf16.mxu0 0
    %937 = vmatpush1.bf16.msra.mxu0 0
    %938 = vmatprep.subr.bf16.mxu0 0
    %939 = vmatpush1.bf16.msra.mxu0 0
    %940 = vmatprep.subr.bf16.mxu0 0
    %941 = vmatpush1.bf16.msra.mxu0 0
    %942 = vmatprep.subr.bf16.mxu0 0
    %943 = vmatpush1.bf16.msra.mxu0 0
    %944 = vmatprep.subr.bf16.mxu0 0
    %945 = vmatpush1.bf16.msra.mxu0 0
    %946 = vmatprep.subr.bf16.mxu0 0
    %947 = vmatpush1.bf16.msra.mxu0 0
    %948 = vmatprep.subr.bf16.mxu0 0
    %949 = vmatpush1.bf16.msra.mxu0 0
    %950 = vmatprep.subr.bf16.mxu0 0
    %951 = vmatpush1.bf16.msra.mxu0 0
    %952 = vmatprep.mubr.bf16.mxu0 0
    %953 = vmatmul.mubr.bf16.gmra.mrb[0].mxu0 %v918
    %v954 = vpop.f32.mrb[0].mxu0
    %v955 = vadd.f32 0.0, %v954
    %v956 = vpop.f32.mrb[0].mxu0
    %v957 = vpop.f32.mrb[0].mxu0
    %v958 = vadd.f32 0.0, %v957
    %v959 = vpop.f32.mrb[0].mxu0
    %960 = vdwg.mxu0
    %v961 = vrcp.pop %v909
    %v962 = vrcp.pop %v912
    %v963 = vmul.f32 %v955, %v961
    %v964 = vmul.f32 %v958, %v962
    %v965 = vpack.c.bf16 %v964, %v963
    %v966 = vld [vmem:[#allocation7] sm:$0xf]
    %967 = vrot.lane.b32.xlu0 %v144, 120
    %v968 = vpop.permute.xlu0 %967
    %969 = vrot.lane.b32.xlu0 %v144, 88
    %v970 = vpop.permute.xlu0 %969
    %v972 = vsel %vm151, %v968, 0
    %v975 = vsel %vm151, %v970, 0
    %977 = vmatprep.subr.bf16.mxu0 0
    %978 = vmatpush1.bf16.xpose.msra.mxu0 %v975
    %979 = vmatprep.subr.bf16.mxu0 0
    %980 = vmatpush1.bf16.xpose.msra.mxu0 0
    %981 = vmatprep.subr.bf16.mxu0 0
    %982 = vmatpush1.bf16.xpose.msra.mxu0 0
    %983 = vmatprep.subr.bf16.mxu0 0
    %984 = vmatpush1.bf16.xpose.msra.mxu0 0
    %985 = vmatprep.subr.bf16.mxu0 0
    %986 = vmatpush1.bf16.xpose.msra.mxu0 0
    %987 = vmatprep.subr.bf16.mxu0 0
    %988 = vmatpush1.bf16.xpose.msra.mxu0 0
    %989 = vmatprep.subr.bf16.mxu0 0
    %990 = vmatpush1.bf16.xpose.msra.mxu0 0
    %991 = vmatprep.subr.bf16.mxu0 0
    %992 = vmatpush1.bf16.xpose.msra.mxu0 0
    %993 = vmatprep.subr.bf16.mxu0 0
    %994 = vmatpush1.bf16.xpose.msra.mxu0 0
    %995 = vmatprep.subr.bf16.mxu0 0
    %996 = vmatpush1.bf16.xpose.msra.mxu0 0
    %997 = vmatprep.subr.bf16.mxu0 0
    %998 = vmatpush1.bf16.xpose.msra.mxu0 0
    %999 = vmatprep.subr.bf16.mxu0 0
    %1000 = vmatpush1.bf16.xpose.msra.mxu0 0
    %1001 = vmatprep.subr.bf16.mxu0 0
    %1002 = vmatpush1.bf16.xpose.msra.mxu0 0
    %1003 = vmatprep.subr.bf16.mxu0 0
    %1004 = vmatpush1.bf16.xpose.msra.mxu0 0
    %1005 = vmatprep.subr.bf16.mxu0 0
    %1006 = vmatpush1.bf16.xpose.msra.mxu0 0
    %1007 = vmatprep.subr.bf16.mxu0 0
    %1008 = vmatpush1.bf16.xpose.msra.mxu0 0
    %1009 = vmatprep.mubr.bf16.mxu0 0
    %1010 = vmatmul.mubr.bf16.gmra.mrb[0].mxu0 %v972
    %v1011 = vpop.f32.mrb[0].mxu0
    %v1012 = vadd.f32 0.0, %v1011
    %v1013 = vpop.f32.mrb[0].mxu0
    %v1014 = vpop.f32.mrb[0].mxu0
    %v1015 = vadd.f32 0.0, %v1014
    %v1016 = vpop.f32.mrb[0].mxu0
    %1017 = vdwg.mxu0
    %v1018 = vsel %vm199, %v1012, -inf
    %1019 = vmax.xlane.f32.xlu0 %v1018
    %v1020 = vpop.xlane.xlu0 %1019
    %v1021 = vsel %vm199, %v1015, -inf
    %1022 = vmax.xlane.f32.xlu0 %v1021
    %v1023 = vpop.xlane.xlu0 %1022
    %v1024 = vsub.f32 %v1012, %v1020
    %v1025 = vsub.f32 %v1015, %v1023
    %v1026 = vmul.f32 %v1024, 1.442695
    %v1027 = vpow.pop %v1026
    %v1028 = vmul.f32 %v1025, 1.442695
    %v1029 = vpow.pop %v1028
    %v1030 = vsel %vm199, %v1027, 0.0
    %1031 = vadd.xlane.f32.xlu0 %v1030
    %v1032 = vpop.xlane.xlu0 %1031
    %v1033 = vsel %vm199, %v1029, 0.0
    %1034 = vadd.xlane.f32.xlu0 %v1033
    %v1035 = vpop.xlane.xlu0 %1034
    %v1036 = vpack.c.bf16 %v1029, %v1027
    %1037 = vrot.lane.b32.xlu0 %v144, 56
    %v1038 = vpop.permute.xlu0 %1037
    %v1041 = vsel %vm199, %v1036, 0
    %1043 = vmatprep.subr.bf16.mxu0 0
    %1044 = vmatpush1.bf16.msra.mxu0 %v1038
    %1045 = vmatprep.subr.bf16.mxu0 0
    %1046 = vmatpush1.bf16.msra.mxu0 0
    %1047 = vmatprep.subr.bf16.mxu0 0
    %1048 = vmatpush1.bf16.msra.mxu0 0
    %1049 = vmatprep.subr.bf16.mxu0 0
    %1050 = vmatpush1.bf16.msra.mxu0 0
    %1051 = vmatprep.subr.bf16.mxu0 0
    %1052 = vmatpush1.bf16.msra.mxu0 0
    %1053 = vmatprep.subr.bf16.mxu0 0
    %1054 = vmatpush1.bf16.msra.mxu0 0
    %1055 = vmatprep.subr.bf16.mxu0 0
    %1056 = vmatpush1.bf16.msra.mxu0 0
    %1057 = vmatprep.subr.bf16.mxu0 0
    %1058 = vmatpush1.bf16.msra.mxu0 0
    %1059 = vmatprep.subr.bf16.mxu0 0
    %1060 = vmatpush1.bf16.msra.mxu0 0
    %1061 = vmatprep.subr.bf16.mxu0 0
    %1062 = vmatpush1.bf16.msra.mxu0 0
    %1063 = vmatprep.subr.bf16.mxu0 0
    %1064 = vmatpush1.bf16.msra.mxu0 0
    %1065 = vmatprep.subr.bf16.mxu0 0
    %1066 = vmatpush1.bf16.msra.mxu0 0
    %1067 = vmatprep.subr.bf16.mxu0 0
    %1068 = vmatpush1.bf16.msra.mxu0 0
    %1069 = vmatprep.subr.bf16.mxu0 0
    %1070 = vmatpush1.bf16.msra.mxu0 0
    %1071 = vmatprep.subr.bf16.mxu0 0
    %1072 = vmatpush1.bf16.msra.mxu0 0
    %1073 = vmatprep.subr.bf16.mxu0 0
    %1074 = vmatpush1.bf16.msra.mxu0 0
    %1075 = vmatprep.mubr.bf16.mxu0 0
    %1076 = vmatmul.mubr.bf16.gmra.mrb[0].mxu0 %v1041
    %v1077 = vpop.f32.mrb[0].mxu0
    %v1078 = vadd.f32 0.0, %v1077
    %v1079 = vpop.f32.mrb[0].mxu0
    %v1080 = vpop.f32.mrb[0].mxu0
    %v1081 = vadd.f32 0.0, %v1080
    %v1082 = vpop.f32.mrb[0].mxu0
    %1083 = vdwg.mxu0
    %v1084 = vrcp.pop %v1032
    %v1085 = vrcp.pop %v1035
    %v1086 = vmul.f32 %v1078, %v1084
    %v1087 = vmul.f32 %v1081, %v1085
    %v1088 = vpack.c.bf16 %v1087, %v1086
    %v1089 = vld [vmem:[%s394] sm:$0xf]
    %v1091 = vsel %vm151, %v1088, 0
    %v1094 = vsel %vm399, %v1089, 0
    %1096 = vmatprep.subr.bf16.mxu0 0
    %1097 = vmatpush1.bf16.msra.mxu0 %v1094
    %1098 = vmatprep.subr.bf16.mxu0 0
    %1099 = vmatpush1.bf16.msra.mxu0 0
    %1100 = vmatprep.subr.bf16.mxu0 0
    %1101 = vmatpush1.bf16.msra.mxu0 0
    %1102 = vmatprep.subr.bf16.mxu0 0
    %1103 = vmatpush1.bf16.msra.mxu0 0
    %1104 = vmatprep.subr.bf16.mxu0 0
    %1105 = vmatpush1.bf16.msra.mxu0 0
    %1106 = vmatprep.subr.bf16.mxu0 0
    %1107 = vmatpush1.bf16.msra.mxu0 0
    %1108 = vmatprep.subr.bf16.mxu0 0
    %1109 = vmatpush1.bf16.msra.mxu0 0
    %1110 = vmatprep.subr.bf16.mxu0 0
    %1111 = vmatpush1.bf16.msra.mxu0 0
    %1112 = vmatprep.subr.bf16.mxu0 0
    %1113 = vmatpush1.bf16.msra.mxu0 0
    %1114 = vmatprep.subr.bf16.mxu0 0
    %1115 = vmatpush1.bf16.msra.mxu0 0
    %1116 = vmatprep.subr.bf16.mxu0 0
    %1117 = vmatpush1.bf16.msra.mxu0 0
    %1118 = vmatprep.subr.bf16.mxu0 0
    %1119 = vmatpush1.bf16.msra.mxu0 0
    %1120 = vmatprep.subr.bf16.mxu0 0
    %1121 = vmatpush1.bf16.msra.mxu0 0
    %1122 = vmatprep.subr.bf16.mxu0 0
    %1123 = vmatpush1.bf16.msra.mxu0 0
    %1124 = vmatprep.subr.bf16.mxu0 0
    %1125 = vmatpush1.bf16.msra.mxu0 0
    %1126 = vmatprep.subr.bf16.mxu0 0
    %1127 = vmatpush1.bf16.msra.mxu0 0
    %1128 = vmatprep.mubr.bf16.mxu0 0
    %1129 = vmatmul.mubr.bf16.gmra.mrb[0].mxu0 %v1091
    %v1130 = vpop.f32.mrb[0].mxu0
    %v1131 = vadd.f32 0.0, %v1130
    %v1132 = vpop.f32.mrb[0].mxu0
    %v1133 = vpop.f32.mrb[0].mxu0
    %v1134 = vadd.f32 0.0, %v1133
    %v1135 = vpop.f32.mrb[0].mxu0
    %1136 = vdwg.mxu0
    %v1138 = vsel %vm151, %v965, 0
    %v1141 = vsel %vm399, %v966, 0
    %1143 = vmatprep.subr.bf16.mxu0 0
    %1144 = vmatpush1.bf16.msra.mxu0 %v1141
    %1145 = vmatprep.subr.bf16.mxu0 0
    %1146 = vmatpush1.bf16.msra.mxu0 0
    %1147 = vmatprep.subr.bf16.mxu0 0
    %1148 = vmatpush1.bf16.msra.mxu0 0
    %1149 = vmatprep.subr.bf16.mxu0 0
    %1150 = vmatpush1.bf16.msra.mxu0 0
    %1151 = vmatprep.subr.bf16.mxu0 0
    %1152 = vmatpush1.bf16.msra.mxu0 0
    %1153 = vmatprep.subr.bf16.mxu0 0
    %1154 = vmatpush1.bf16.msra.mxu0 0
    %1155 = vmatprep.subr.bf16.mxu0 0
    %1156 = vmatpush1.bf16.msra.mxu0 0
    %1157 = vmatprep.subr.bf16.mxu0 0
    %1158 = vmatpush1.bf16.msra.mxu0 0
    %1159 = vmatprep.subr.bf16.mxu0 0
    %1160 = vmatpush1.bf16.msra.mxu0 0
    %1161 = vmatprep.subr.bf16.mxu0 0
    %1162 = vmatpush1.bf16.msra.mxu0 0
    %1163 = vmatprep.subr.bf16.mxu0 0
    %1164 = vmatpush1.bf16.msra.mxu0 0
    %1165 = vmatprep.subr.bf16.mxu0 0
    %1166 = vmatpush1.bf16.msra.mxu0 0
    %1167 = vmatprep.subr.bf16.mxu0 0
    %1168 = vmatpush1.bf16.msra.mxu0 0
    %1169 = vmatprep.subr.bf16.mxu0 0
    %1170 = vmatpush1.bf16.msra.mxu0 0
    %1171 = vmatprep.subr.bf16.mxu0 0
    %1172 = vmatpush1.bf16.msra.mxu0 0
    %1173 = vmatprep.subr.bf16.mxu0 0
    %1174 = vmatpush1.bf16.msra.mxu0 0
    %1175 = vmatprep.mubr.bf16.mxu0 0
    %1176 = vmatmul.mubr.bf16.gmra.mrb[0].mxu0 %v1138
    %v1177 = vpop.f32.mrb[0].mxu0
    %v1178 = vadd.f32 %v1131, %v1177
    %v1179 = vpop.f32.mrb[0].mxu0
    %v1180 = vpop.f32.mrb[0].mxu0
    %v1181 = vadd.f32 %v1134, %v1180
    %v1182 = vpop.f32.mrb[0].mxu0
    %1183 = vdwg.mxu0
    %1184 = vrot.lane.b32.xlu0 %v144, 112
    %v1185 = vpop.permute.xlu0 %1184
    %1186 = vrot.lane.b32.xlu0 %v144, 80
    %v1187 = vpop.permute.xlu0 %1186
    %v1189 = vsel %vm151, %v1185, 0
    %v1192 = vsel %vm151, %v1187, 0
    %1194 = vmatprep.subr.bf16.mxu0 0
    %1195 = vmatpush1.bf16.xpose.msra.mxu0 %v1192
    %1196 = vmatprep.subr.bf16.mxu0 0
    %1197 = vmatpush1.bf16.xpose.msra.mxu0 0
    %1198 = vmatprep.subr.bf16.mxu0 0
    %1199 = vmatpush1.bf16.xpose.msra.mxu0 0
    %1200 = vmatprep.subr.bf16.mxu0 0
    %1201 = vmatpush1.bf16.xpose.msra.mxu0 0
    %1202 = vmatprep.subr.bf16.mxu0 0
    %1203 = vmatpush1.bf16.xpose.msra.mxu0 0
    %1204 = vmatprep.subr.bf16.mxu0 0
    %1205 = vmatpush1.bf16.xpose.msra.mxu0 0
    %1206 = vmatprep.subr.bf16.mxu0 0
    %1207 = vmatpush1.bf16.xpose.msra.mxu0 0
    %1208 = vmatprep.subr.bf16.mxu0 0
    %1209 = vmatpush1.bf16.xpose.msra.mxu0 0
    %1210 = vmatprep.subr.bf16.mxu0 0
    %1211 = vmatpush1.bf16.xpose.msra.mxu0 0
    %1212 = vmatprep.subr.bf16.mxu0 0
    %1213 = vmatpush1.bf16.xpose.msra.mxu0 0
    %1214 = vmatprep.subr.bf16.mxu0 0
    %1215 = vmatpush1.bf16.xpose.msra.mxu0 0
    %1216 = vmatprep.subr.bf16.mxu0 0
    %1217 = vmatpush1.bf16.xpose.msra.mxu0 0
    %1218 = vmatprep.subr.bf16.mxu0 0
    %1219 = vmatpush1.bf16.xpose.msra.mxu0 0
    %1220 = vmatprep.subr.bf16.mxu0 0
    %1221 = vmatpush1.bf16.xpose.msra.mxu0 0
    %1222 = vmatprep.subr.bf16.mxu0 0
    %1223 = vmatpush1.bf16.xpose.msra.mxu0 0
    %1224 = vmatprep.subr.bf16.mxu0 0
    %1225 = vmatpush1.bf16.xpose.msra.mxu0 0
    %1226 = vmatprep.mubr.bf16.mxu0 0
    %1227 = vmatmul.mubr.bf16.gmra.mrb[0].mxu0 %v1189
    %v1228 = vpop.f32.mrb[0].mxu0
    %v1229 = vadd.f32 0.0, %v1228
    %v1230 = vpop.f32.mrb[0].mxu0
    %v1231 = vpop.f32.mrb[0].mxu0
    %v1232 = vadd.f32 0.0, %v1231
    %v1233 = vpop.f32.mrb[0].mxu0
    %1234 = vdwg.mxu0
    %v1235 = vsel %vm199, %v1229, -inf
    %1236 = vmax.xlane.f32.xlu0 %v1235
    %v1237 = vpop.xlane.xlu0 %1236
    %v1238 = vsel %vm199, %v1232, -inf
    %1239 = vmax.xlane.f32.xlu0 %v1238
    %v1240 = vpop.xlane.xlu0 %1239
    %v1241 = vsub.f32 %v1229, %v1237
    %v1242 = vsub.f32 %v1232, %v1240
    %v1243 = vmul.f32 %v1241, 1.442695
    %v1244 = vpow.pop %v1243
    %v1245 = vmul.f32 %v1242, 1.442695
    %v1246 = vpow.pop %v1245
    %v1247 = vsel %vm199, %v1244, 0.0
    %1248 = vadd.xlane.f32.xlu0 %v1247
    %v1249 = vpop.xlane.xlu0 %1248
    %v1250 = vsel %vm199, %v1246, 0.0
    %1251 = vadd.xlane.f32.xlu0 %v1250
    %v1252 = vpop.xlane.xlu0 %1251
    %v1253 = vpack.c.bf16 %v1246, %v1244
    %1254 = vrot.lane.b32.xlu0 %v144, 48
    %v1255 = vpop.permute.xlu0 %1254
    %v1258 = vsel %vm199, %v1253, 0
    %1260 = vmatprep.subr.bf16.mxu0 0
    %1261 = vmatpush1.bf16.msra.mxu0 %v1255
    %1262 = vmatprep.subr.bf16.mxu0 0
    %1263 = vmatpush1.bf16.msra.mxu0 0
    %1264 = vmatprep.subr.bf16.mxu0 0
    %1265 = vmatpush1.bf16.msra.mxu0 0
    %1266 = vmatprep.subr.bf16.mxu0 0
    %1267 = vmatpush1.bf16.msra.mxu0 0
    %1268 = vmatprep.subr.bf16.mxu0 0
    %1269 = vmatpush1.bf16.msra.mxu0 0
    %1270 = vmatprep.subr.bf16.mxu0 0
    %1271 = vmatpush1.bf16.msra.mxu0 0
    %1272 = vmatprep.subr.bf16.mxu0 0
    %1273 = vmatpush1.bf16.msra.mxu0 0
    %1274 = vmatprep.subr.bf16.mxu0 0
    %1275 = vmatpush1.bf16.msra.mxu0 0
    %1276 = vmatprep.subr.bf16.mxu0 0
    %1277 = vmatpush1.bf16.msra.mxu0 0
    %1278 = vmatprep.subr.bf16.mxu0 0
    %1279 = vmatpush1.bf16.msra.mxu0 0
    %1280 = vmatprep.subr.bf16.mxu0 0
    %1281 = vmatpush1.bf16.msra.mxu0 0
    %1282 = vmatprep.subr.bf16.mxu0 0
    %1283 = vmatpush1.bf16.msra.mxu0 0
    %1284 = vmatprep.subr.bf16.mxu0 0
    %1285 = vmatpush1.bf16.msra.mxu0 0
    %1286 = vmatprep.subr.bf16.mxu0 0
    %1287 = vmatpush1.bf16.msra.mxu0 0
    %1288 = vmatprep.subr.bf16.mxu0 0
    %1289 = vmatpush1.bf16.msra.mxu0 0
    %1290 = vmatprep.subr.bf16.mxu0 0
    %1291 = vmatpush1.bf16.msra.mxu0 0
    %1292 = vmatprep.mubr.bf16.mxu0 0
    %1293 = vmatmul.mubr.bf16.gmra.mrb[0].mxu0 %v1258
    %v1294 = vpop.f32.mrb[0].mxu0
    %v1295 = vadd.f32 0.0, %v1294
    %v1296 = vpop.f32.mrb[0].mxu0
    %v1297 = vpop.f32.mrb[0].mxu0
    %v1298 = vadd.f32 0.0, %v1297
    %v1299 = vpop.f32.mrb[0].mxu0
    %1300 = vdwg.mxu0
    %v1301 = vrcp.pop %v1249
    %v1302 = vrcp.pop %v1252
    %v1303 = vmul.f32 %v1295, %v1301
    %v1304 = vmul.f32 %v1298, %v1302
    %v1305 = vpack.c.bf16 %v1304, %v1303
    %v1306 = vld [vmem:[%s613] sm:$0xf]
    %v1308 = vsel %vm151, %v1305, 0
    %v1311 = vsel %vm399, %v1306, 0
    %1313 = vmatprep.subr.bf16.mxu0 0
    %1314 = vmatpush1.bf16.msra.mxu0 %v1311
    %1315 = vmatprep.subr.bf16.mxu0 0
    %1316 = vmatpush1.bf16.msra.mxu0 0
    %1317 = vmatprep.subr.bf16.mxu0 0
    %1318 = vmatpush1.bf16.msra.mxu0 0
    %1319 = vmatprep.subr.bf16.mxu0 0
    %1320 = vmatpush1.bf16.msra.mxu0 0
    %1321 = vmatprep.subr.bf16.mxu0 0
    %1322 = vmatpush1.bf16.msra.mxu0 0
    %1323 = vmatprep.subr.bf16.mxu0 0
    %1324 = vmatpush1.bf16.msra.mxu0 0
    %1325 = vmatprep.subr.bf16.mxu0 0
    %1326 = vmatpush1.bf16.msra.mxu0 0
    %1327 = vmatprep.subr.bf16.mxu0 0
    %1328 = vmatpush1.bf16.msra.mxu0 0
    %1329 = vmatprep.subr.bf16.mxu0 0
    %1330 = vmatpush1.bf16.msra.mxu0 0
    %1331 = vmatprep.subr.bf16.mxu0 0
    %1332 = vmatpush1.bf16.msra.mxu0 0
    %1333 = vmatprep.subr.bf16.mxu0 0
    %1334 = vmatpush1.bf16.msra.mxu0 0
    %1335 = vmatprep.subr.bf16.mxu0 0
    %1336 = vmatpush1.bf16.msra.mxu0 0
    %1337 = vmatprep.subr.bf16.mxu0 0
    %1338 = vmatpush1.bf16.msra.mxu0 0
    %1339 = vmatprep.subr.bf16.mxu0 0
    %1340 = vmatpush1.bf16.msra.mxu0 0
    %1341 = vmatprep.subr.bf16.mxu0 0
    %1342 = vmatpush1.bf16.msra.mxu0 0
    %1343 = vmatprep.subr.bf16.mxu0 0
    %1344 = vmatpush1.bf16.msra.mxu0 0
    %1345 = vmatprep.mubr.bf16.mxu0 0
    %1346 = vmatmul.mubr.bf16.gmra.mrb[0].mxu0 %v1308
    %v1347 = vpop.f32.mrb[0].mxu0
    %v1348 = vadd.f32 0.0, %v1347
    %v1349 = vpop.f32.mrb[0].mxu0
    %v1350 = vpop.f32.mrb[0].mxu0
    %v1351 = vadd.f32 0.0, %v1350
    %v1352 = vpop.f32.mrb[0].mxu0
    %1353 = vdwg.mxu0
    %v1354 = vadd.f32 %v1178, %v1348
    %v1355 = vadd.f32 %v1181, %v1351
    %1356 = vrot.lane.b32.xlu0 %v144, 104
    %v1357 = vpop.permute.xlu0 %1356
    %1358 = vrot.lane.b32.xlu0 %v144, 72
    %v1359 = vpop.permute.xlu0 %1358
    %v1361 = vsel %vm151, %v1357, 0
    %v1364 = vsel %vm151, %v1359, 0
    %1366 = vmatprep.subr.bf16.mxu0 0
    %1367 = vmatpush1.bf16.xpose.msra.mxu0 %v1364
    %1368 = vmatprep.subr.bf16.mxu0 0
    %1369 = vmatpush1.bf16.xpose.msra.mxu0 0
    %1370 = vmatprep.subr.bf16.mxu0 0
    %1371 = vmatpush1.bf16.xpose.msra.mxu0 0
    %1372 = vmatprep.subr.bf16.mxu0 0
    %1373 = vmatpush1.bf16.xpose.msra.mxu0 0
    %1374 = vmatprep.subr.bf16.mxu0 0
    %1375 = vmatpush1.bf16.xpose.msra.mxu0 0
    %1376 = vmatprep.subr.bf16.mxu0 0
    %1377 = vmatpush1.bf16.xpose.msra.mxu0 0
    %1378 = vmatprep.subr.bf16.mxu0 0
    %1379 = vmatpush1.bf16.xpose.msra.mxu0 0
    %1380 = vmatprep.subr.bf16.mxu0 0
    %1381 = vmatpush1.bf16.xpose.msra.mxu0 0
    %1382 = vmatprep.subr.bf16.mxu0 0
    %1383 = vmatpush1.bf16.xpose.msra.mxu0 0
    %1384 = vmatprep.subr.bf16.mxu0 0
    %1385 = vmatpush1.bf16.xpose.msra.mxu0 0
    %1386 = vmatprep.subr.bf16.mxu0 0
    %1387 = vmatpush1.bf16.xpose.msra.mxu0 0
    %1388 = vmatprep.subr.bf16.mxu0 0
    %1389 = vmatpush1.bf16.xpose.msra.mxu0 0
    %1390 = vmatprep.subr.bf16.mxu0 0
    %1391 = vmatpush1.bf16.xpose.msra.mxu0 0
    %1392 = vmatprep.subr.bf16.mxu0 0
    %1393 = vmatpush1.bf16.xpose.msra.mxu0 0
    %1394 = vmatprep.subr.bf16.mxu0 0
    %1395 = vmatpush1.bf16.xpose.msra.mxu0 0
    %1396 = vmatprep.subr.bf16.mxu0 0
    %1397 = vmatpush1.bf16.xpose.msra.mxu0 0
    %1398 = vmatprep.mubr.bf16.mxu0 0
    %1399 = vmatmul.mubr.bf16.gmra.mrb[0].mxu0 %v1361
    %v1400 = vpop.f32.mrb[0].mxu0
    %v1401 = vadd.f32 0.0, %v1400
    %v1402 = vpop.f32.mrb[0].mxu0
    %v1403 = vpop.f32.mrb[0].mxu0
    %v1404 = vadd.f32 0.0, %v1403
    %v1405 = vpop.f32.mrb[0].mxu0
    %1406 = vdwg.mxu0
    %v1407 = vsel %vm199, %v1401, -inf
    %1408 = vmax.xlane.f32.xlu0 %v1407
    %v1409 = vpop.xlane.xlu0 %1408
    %v1410 = vsel %vm199, %v1404, -inf
    %1411 = vmax.xlane.f32.xlu0 %v1410
    %v1412 = vpop.xlane.xlu0 %1411
    %v1413 = vsub.f32 %v1401, %v1409
    %v1414 = vsub.f32 %v1404, %v1412
    %v1415 = vmul.f32 %v1413, 1.442695
    %v1416 = vpow.pop %v1415
    %v1417 = vmul.f32 %v1414, 1.442695
    %v1418 = vpow.pop %v1417
    %v1419 = vsel %vm199, %v1416, 0.0
    %1420 = vadd.xlane.f32.xlu0 %v1419
    %v1421 = vpop.xlane.xlu0 %1420
    %v1422 = vsel %vm199, %v1418, 0.0
    %1423 = vadd.xlane.f32.xlu0 %v1422
    %v1424 = vpop.xlane.xlu0 %1423
    %v1425 = vpack.c.bf16 %v1418, %v1416
    %1426 = vrot.lane.b32.xlu0 %v144, 40
    %v1427 = vpop.permute.xlu0 %1426
    %v1430 = vsel %vm199, %v1425, 0
    %1432 = vmatprep.subr.bf16.mxu0 0
    %1433 = vmatpush1.bf16.msra.mxu0 %v1427
    %1434 = vmatprep.subr.bf16.mxu0 0
    %1435 = vmatpush1.bf16.msra.mxu0 0
    %1436 = vmatprep.subr.bf16.mxu0 0
    %1437 = vmatpush1.bf16.msra.mxu0 0
    %1438 = vmatprep.subr.bf16.mxu0 0
    %1439 = vmatpush1.bf16.msra.mxu0 0
    %1440 = vmatprep.subr.bf16.mxu0 0
    %1441 = vmatpush1.bf16.msra.mxu0 0
    %1442 = vmatprep.subr.bf16.mxu0 0
    %1443 = vmatpush1.bf16.msra.mxu0 0
    %1444 = vmatprep.subr.bf16.mxu0 0
    %1445 = vmatpush1.bf16.msra.mxu0 0
    %1446 = vmatprep.subr.bf16.mxu0 0
    %1447 = vmatpush1.bf16.msra.mxu0 0
    %1448 = vmatprep.subr.bf16.mxu0 0
    %1449 = vmatpush1.bf16.msra.mxu0 0
    %1450 = vmatprep.subr.bf16.mxu0 0
    %1451 = vmatpush1.bf16.msra.mxu0 0
    %1452 = vmatprep.subr.bf16.mxu0 0
    %1453 = vmatpush1.bf16.msra.mxu0 0
    %1454 = vmatprep.subr.bf16.mxu0 0
    %1455 = vmatpush1.bf16.msra.mxu0 0
    %1456 = vmatprep.subr.bf16.mxu0 0
    %1457 = vmatpush1.bf16.msra.mxu0 0
    %1458 = vmatprep.subr.bf16.mxu0 0
    %1459 = vmatpush1.bf16.msra.mxu0 0
    %1460 = vmatprep.subr.bf16.mxu0 0
    %1461 = vmatpush1.bf16.msra.mxu0 0
    %1462 = vmatprep.subr.bf16.mxu0 0
    %1463 = vmatpush1.bf16.msra.mxu0 0
    %1464 = vmatprep.mubr.bf16.mxu0 0
    %1465 = vmatmul.mubr.bf16.gmra.mrb[0].mxu0 %v1430
    %v1466 = vpop.f32.mrb[0].mxu0
    %v1467 = vadd.f32 0.0, %v1466
    %v1468 = vpop.f32.mrb[0].mxu0
    %v1469 = vpop.f32.mrb[0].mxu0
    %v1470 = vadd.f32 0.0, %v1469
    %v1471 = vpop.f32.mrb[0].mxu0
    %1472 = vdwg.mxu0
    %v1473 = vrcp.pop %v1421
    %v1474 = vrcp.pop %v1424
    %v1475 = vmul.f32 %v1467, %v1473
    %v1476 = vmul.f32 %v1470, %v1474
    %v1477 = vpack.c.bf16 %v1476, %v1475
    %v1478 = vld [vmem:[%s786] sm:$0xf]
    %v1480 = vsel %vm151, %v1477, 0
    %v1483 = vsel %vm399, %v1478, 0
    %1485 = vmatprep.subr.bf16.mxu0 0
    %1486 = vmatpush1.bf16.msra.mxu0 %v1483
    %1487 = vmatprep.subr.bf16.mxu0 0
    %1488 = vmatpush1.bf16.msra.mxu0 0
    %1489 = vmatprep.subr.bf16.mxu0 0
    %1490 = vmatpush1.bf16.msra.mxu0 0
    %1491 = vmatprep.subr.bf16.mxu0 0
    %1492 = vmatpush1.bf16.msra.mxu0 0
    %1493 = vmatprep.subr.bf16.mxu0 0
    %1494 = vmatpush1.bf16.msra.mxu0 0
    %1495 = vmatprep.subr.bf16.mxu0 0
    %1496 = vmatpush1.bf16.msra.mxu0 0
    %1497 = vmatprep.subr.bf16.mxu0 0
    %1498 = vmatpush1.bf16.msra.mxu0 0
    %1499 = vmatprep.subr.bf16.mxu0 0
    %1500 = vmatpush1.bf16.msra.mxu0 0
    %1501 = vmatprep.subr.bf16.mxu0 0
    %1502 = vmatpush1.bf16.msra.mxu0 0
    %1503 = vmatprep.subr.bf16.mxu0 0
    %1504 = vmatpush1.bf16.msra.mxu0 0
    %1505 = vmatprep.subr.bf16.mxu0 0
    %1506 = vmatpush1.bf16.msra.mxu0 0
    %1507 = vmatprep.subr.bf16.mxu0 0
    %1508 = vmatpush1.bf16.msra.mxu0 0
    %1509 = vmatprep.subr.bf16.mxu0 0
    %1510 = vmatpush1.bf16.msra.mxu0 0
    %1511 = vmatprep.subr.bf16.mxu0 0
    %1512 = vmatpush1.bf16.msra.mxu0 0
    %1513 = vmatprep.subr.bf16.mxu0 0
    %1514 = vmatpush1.bf16.msra.mxu0 0
    %1515 = vmatprep.subr.bf16.mxu0 0
    %1516 = vmatpush1.bf16.msra.mxu0 0
    %1517 = vmatprep.mubr.bf16.mxu0 0
    %1518 = vmatmul.mubr.bf16.gmra.mrb[0].mxu0 %v1480
    %v1519 = vpop.f32.mrb[0].mxu0
    %v1520 = vadd.f32 0.0, %v1519
    %v1521 = vpop.f32.mrb[0].mxu0
    %v1522 = vpop.f32.mrb[0].mxu0
    %v1523 = vadd.f32 0.0, %v1522
    %v1524 = vpop.f32.mrb[0].mxu0
    %1525 = vdwg.mxu0
    %v1526 = vadd.f32 %v1354, %v1520
    %v1527 = vadd.f32 %v1355, %v1523
    %v1528 = vadd.f32 %v1526, %v840
    %v1529 = vadd.f32 %v1527, %v840
    %1530 = vst.msk [vmem:[#allocation8 + $0x10] sm:$0xff] %vm87, %v1528
    %1531 = vst.msk [vmem:[#allocation8 + $0x18] sm:$0xff] %vm87, %v1529
    // Predicated region
    $region26: #{tpu_custom_call.1} parent=1 // pred_check
      _
    $region27: #{tpu_custom_call.1} parent=1 // pred_check_branch
      %1533 = sbr.rel (0) target = $region29
    $region28: #{tpu_custom_call.1} parent=1 // pred_region
      %s1535 = ssub.s32 512, 512
      %1536 = vsyncadd [#allocation4], %s1535
      %s1537 = sshll.u32 [#allocation8], 4
      %s1538 = int_to_ptr.vmem [resolvable:$true] %s1537
      %1543 = dma.vmem_to_hbm [thread:$0]  %s1538, 512, %s3, [#allocation4], 128, 128, 8
    $region29: #{tpu_custom_call.1} parent=1 // pred_fallthru
      _
    // Predicated region
    $region30: #{tpu_custom_call.1} parent=1 // pred_check
      _
    $region31: #{tpu_custom_call.1} parent=1 // pred_check_branch
      %1545 = sbr.rel (0) target = $region33
    $region32: #{tpu_custom_call.1} parent=1 // pred_region
      %1546 = dma.done [#allocation4], 512
    $region33: #{tpu_custom_call.1} parent=1 // pred_fallthru
      _
    %1547 = vsyncpa [#allocation3], 1
    %1548 = vsyncpa [#allocation6], 1
    %1549 = vsyncpa [#allocation4], 1

</llo_original>
